<compile_context>
chip_gen: v7x
topology: tpu7x:2x2x1
jax: 0.10.0
libtpu: 0.0.40
codegen_flags: <defaults>
</compile_context>

<pallas_src>
import math
import numpy as np
import jax
import jax.numpy as jnp
from jax import lax
from jax.experimental import pallas as pl

H1 = 128     # first controller hidden width (fixed by the module)
H2 = 64      # second controller hidden width (fixed by the module)
LANES = 128  # lane width of the packed parameter / output buffers


def _round8(n):
    return ((n + 7) // 8) * 8


def pack_params(p):
    """Pack all weights/biases into one lane-dense (rows, 128) f32 buffer.

    Sections (each 8-row aligned, zero-padded to 128 lanes):
      w1 (in,128), b1 (1,128), w2 (128,64), b2 (1,64),
      wa (64,MS), ba (1,MS),
      wcw = [write_head | output_layer_controller_half] (64, V+out),
      bcw = [bw | bo] (1, V+out),
      wo_r shifted left-padded by V lanes so its `out` columns line up with the
      out_c lanes of `wcw` (epilogue add needs no relayout).

    Returns (packed, offsets) with offsets ordered as
    (w1, b1, w2, b2, wa, ba, wcw, bcw, wo_r).
    """
    V = p["ww"].shape[1]
    wcw = jnp.concatenate([p["ww"], p["wo_c"]], axis=1)      # (64, V+out)
    bcw = jnp.concatenate([p["bw"], p["bo"]], axis=1)        # (1,  V+out)
    wo_r_shift = jnp.pad(p["wo_r"], ((0, 0), (V, 0)))        # (V,  V+out)

    blocks = [p["w1"], p["b1"], p["w2"], p["b2"],
              p["wa"], p["ba"], wcw, bcw, wo_r_shift]

    padded, offsets, row = [], [], 0
    for a in blocks:
        r, c = a.shape
        assert c <= LANES, "parameter section wider than one lane tile"
        rp = _round8(r)
        padded.append(jnp.pad(a, ((0, rp - r), (0, LANES - c))))
        offsets.append(row)
        row += rp
    return jnp.concatenate(padded, axis=0), tuple(offsets)


def make_ntm_kernel(T, T_pad, input_dim, output_dim, memory_size,
                    memory_vector_dim, offs):
    o_w1, o_b1, o_w2, o_b2, o_wa, o_ba, o_wcw, o_bcw, o_wor = offs
    MS, V, OUT = memory_size, memory_vector_dim, output_dim

    def kernel(p_ref, x_ref, mem_ref, out_ref, new_mem_ref):
        # ----------------- batched prologue (M = T_pad on the MXU) -----------------
        x = x_ref[...]                                                     # (T_pad, in)
        h1 = jnp.maximum(
            jnp.dot(x, p_ref[o_w1:o_w1 + input_dim, :],
                    preferred_element_type=jnp.float32)
            + p_ref[o_b1:o_b1 + 1, :], 0.0)                                # (T_pad, 128)
        h2 = jnp.maximum(
            jnp.dot(h1, p_ref[o_w2:o_w2 + H1, :H2],
                    preferred_element_type=jnp.float32)
            + p_ref[o_b2:o_b2 + 1, :H2], 0.0)                              # (T_pad, 64)

        # addressing logits, lane-padded to 128 and softmaxed with a lane mask
        lane128 = lax.broadcasted_iota(jnp.int32, (1, LANES), 1)
        logits = (jnp.dot(h2, p_ref[o_wa:o_wa + H2, :],
                          preferred_element_type=jnp.float32)
                  + p_ref[o_ba:o_ba + 1, :])                               # (T_pad, 128)
        logits = jnp.where(lane128 < MS, logits, -1e30)
        e = jnp.exp(logits - jnp.max(logits, axis=1, keepdims=True))
        aw = e / jnp.sum(e, axis=1, keepdims=True)                         # (T_pad, 128)
        awT = jnp.transpose(aw)                                            # (128, T_pad): one aligned XLU transpose
        awT_ms = awT[:MS, :]                                               # (MS, T_pad)

        # fused [write head | output-layer controller half], lanes [0,V) / [V,V+OUT)
        cw = (jnp.dot(h2, p_ref[o_wcw:o_wcw + H2, :],
                      preferred_element_type=jnp.float32)
              + p_ref[o_bcw:o_bcw + 1, :])                                 # (T_pad, 128)
        write = cw[:, :V]                                                  # (T_pad, V)

        # loop-invariant index masks (hoisted; JAX does not CSE broadcast_in_dim)
        lane_t = lax.broadcasted_iota(jnp.int32, (1, T_pad), 1)
        row_t = lax.broadcasted_iota(jnp.int32, (T_pad, 1), 0)

        # ------------- serial recurrence: read + memory update only (VPU/XLU) -------------
        def step(t, carry):
            mem, reads = carry                                             # (MS,V), (T_pad,V)
            # column t of the addressing weights, as a (MS,1) sublane vector
            w0 = jnp.sum(jnp.where(lane_t == t, awT_ms, 0.0),
                         axis=1, keepdims=True)                            # (MS, 1)
            # row t of the write vectors
            wr = jnp.sum(jnp.where(row_t == t, write, 0.0),
                         axis=0, keepdims=True)                            # (1, V)
            # read uses the PRE-update memory
            rd = jnp.sum(mem * w0, axis=0, keepdims=True)                  # (1, V)
            mem = mem * (1.0 - w0) + wr * w0
            reads = reads + jnp.where(row_t == t, rd, 0.0)                 # scatter row t
            return mem, reads

        mem_fin, reads = lax.fori_loop(
            0, T, step,
            (mem_ref[...], jnp.zeros((T_pad, V), jnp.float32)),
            unroll=True if T <= 32 else 8)

        # ------------- epilogue: one matmul, one lane-dense store -------------
        # out lanes [V, V+OUT) = h2 @ wo_c + bo + reads @ wo_r ; other lanes are
        # don't-care and are sliced away by the wrapper.
        out_ref[...] = cw + jnp.dot(reads, p_ref[o_wor:o_wor + V, :],
                                    preferred_element_type=jnp.float32)
        new_mem_ref[...] = mem_fin

    return kernel


def simplified_ntm_forward(xs, params, memory):
    """Run T sequential SimplifiedNTM.forward() steps (batch 1) in one kernel.

    xs: (T, input_dim), memory: (memory_size, memory_vector_dim).
    Returns (outputs (T, output_dim), final memory (memory_size, memory_vector_dim)).
    The caller's `memory` buffer is NOT donated/aliased.
    """
    T, input_dim = xs.shape
    MS, V = memory.shape
    output_dim = params["bo"].shape[1]
    assert MS <= LANES, "memory_size must fit in one lane tile (<=128)"
    assert V + output_dim <= LANES, "memory_vector_dim + output_dim must be <=128"

    T_pad = _round8(T)
    xs_pad = jnp.pad(xs, ((0, T_pad - T), (0, 0)))

    packed, offs = pack_params(params)
    kernel = make_ntm_kernel(T, T_pad, input_dim, output_dim, MS, V, offs)

    # Empty grid: one invocation; every operand/result is a whole-array VMEM
    # block (total footprint ~200 KiB, far under VMEM on v5e/v6e/v7x).
    out_pad, new_mem = pl.pallas_call(
        kernel,
        out_shape=(jax.ShapeDtypeStruct((T_pad, LANES), jnp.float32),
                   jax.ShapeDtypeStruct((MS, V), jnp.float32)),
    )(packed, xs_pad, memory)

    # Kernel output is lane-dense; the real outputs live in lanes [V, V+output_dim).
    return out_pad[:T, V:V + output_dim], new_mem


def init_params(key, input_dim, output_dim, memory_size=10, memory_vector_dim=8):
    """Deterministic PyTorch-nn.Linear-style (uniform +-1/sqrt(fan_in)) init."""
    ks = jax.random.split(key, 10)

    def lin(kw, kb, fan_in, fan_out):
        bound = 1.0 / math.sqrt(fan_in)
        w = jax.random.uniform(kw, (fan_in, fan_out), jnp.float32, -bound, bound)
        b = jax.random.uniform(kb, (1, fan_out), jnp.float32, -bound, bound)
        return w, b

    w1, b1 = lin(ks[0], ks[1], input_dim, 128)
    w2, b2 = lin(ks[2], ks[3], 128, 64)
    wa, ba = lin(ks[4], ks[5], 64, memory_size)
    ww, bw = lin(ks[6], ks[7], 64, memory_vector_dim)
    wo, bo = lin(ks[8], ks[9], 64 + memory_vector_dim, output_dim)
    # read_head Linear(64, memory_vector_dim) exists in __init__ but is unused in forward.
    return dict(w1=w1, b1=b1, w2=w2, b2=b2, wa=wa, ba=ba, ww=ww, bw=bw,
                wo_c=wo[:64, :], wo_r=wo[64:, :], bo=bo)


def ref_forward_seq(xs, p, memory):
    """Pure-JAX reference: T sequential calls of the PyTorch forward (B=1)."""
    outs = []
    mem = memory
    for t in range(xs.shape[0]):
        x = xs[t:t + 1]
        h1 = jax.nn.relu(x @ p["w1"] + p["b1"])
        h2 = jax.nn.relu(h1 @ p["w2"] + p["b2"])
        aw = jax.nn.softmax(h2 @ p["wa"] + p["ba"], axis=1)
        read = aw @ mem
        write = h2 @ p["ww"] + p["bw"]
        w0 = aw[0][:, None]
        mem = mem * (1.0 - w0) + write * w0
        outs.append(h2 @ p["wo_c"] + read @ p["wo_r"] + p["bo"])
    return jnp.concatenate(outs, axis=0), mem


if __name__ == "__main__":
    input_dim, output_dim = 16, 4
    memory_size, memory_vector_dim = 10, 8
    T = 8  # number of sequential forward() calls fused into one kernel launch

    key = jax.random.PRNGKey(0)
    k_x, k_p = jax.random.split(key)
    params = init_params(k_p, input_dim, output_dim, memory_size, memory_vector_dim)
    xs = jax.random.normal(k_x, (T, input_dim), jnp.float32)
    memory = jnp.zeros((memory_size, memory_vector_dim), jnp.float32)  # reset_memory()

    out, new_mem = simplified_ntm_forward(xs, params, memory)
    out = jax.block_until_ready(out)
    new_mem = jax.block_until_ready(new_mem)

    out_ref, mem_ref = ref_forward_seq(xs, params, memory)
    np.testing.assert_allclose(np.asarray(out), np.asarray(out_ref),
                               rtol=1e-4, atol=1e-4)
    np.testing.assert_allclose(np.asarray(new_mem), np.asarray(mem_ref),
                               rtol=1e-4, atol=1e-4)

    print("KERNEL_OK")
</pallas_src>

<mosaic_0001>
module attributes {stable_mosaic.version = 11 : i64} {
  func.func @kernel(%arg0: memref<312x128xf32, #tpu.memory_space<vmem>>, %arg1: memref<8x16xf32, #tpu.memory_space<vmem>>, %arg2: memref<10x8xf32, #tpu.memory_space<vmem>>, %arg3: memref<8x128xf32, #tpu.memory_space<vmem>>, %arg4: memref<10x8xf32, #tpu.memory_space<vmem>>) attributes {dimension_semantics = [], scalar_prefetch = 0 : i64, scratch_operands = 0 : i64, tpu.core_type = #tpu.core_type<tc>} {
    %c0 = arith.constant 0 : index
    %c0_0 = arith.constant 0 : index
    %0 = vector.load %arg1[%c0, %c0_0] : memref<8x16xf32, #tpu.memory_space<vmem>>, vector<8x16xf32>
    %c0_1 = arith.constant 0 : index
    %c0_2 = arith.constant 0 : index
    %1 = vector.load %arg0[%c0_1, %c0_2] : memref<312x128xf32, #tpu.memory_space<vmem>>, vector<16x128xf32>
    %cst = arith.constant dense<0.000000e+00> : vector<8x128xf32>
    %2 = tpu.matmul %0, %1, %cst {dimension_numbers = #tpu.dot_dimension_numbers<[1], [0], [0], [1], [0, 0, 1, 1], [], []>} : vector<8x16xf32>, vector<16x128xf32>, vector<8x128xf32> -> vector<8x128xf32>
    %c16 = arith.constant 16 : index
    %c0_3 = arith.constant 0 : index
    %3 = vector.load %arg0[%c16, %c0_3] : memref<312x128xf32, #tpu.memory_space<vmem>>, vector<1x128xf32>
    %4 = vector.broadcast %3 : vector<1x128xf32> to vector<8x128xf32>
    %5 = arith.addf %2, %4 : vector<8x128xf32>
    %cst_4 = arith.constant 0.000000e+00 : f32
    %6 = vector.broadcast %cst_4 : f32 to vector<8x128xf32>
    %7 = arith.maximumf %5, %6 : vector<8x128xf32>
    %c24 = arith.constant 24 : index
    %c0_5 = arith.constant 0 : index
    %8 = vector.load %arg0[%c24, %c0_5] : memref<312x128xf32, #tpu.memory_space<vmem>>, vector<128x64xf32>
    %cst_6 = arith.constant dense<0.000000e+00> : vector<8x64xf32>
    %9 = tpu.matmul %7, %8, %cst_6 {dimension_numbers = #tpu.dot_dimension_numbers<[1], [0], [0], [1], [0, 0, 1, 1], [], []>} : vector<8x128xf32>, vector<128x64xf32>, vector<8x64xf32> -> vector<8x64xf32>
    %c152 = arith.constant 152 : index
    %c0_7 = arith.constant 0 : index
    %10 = vector.load %arg0[%c152, %c0_7] : memref<312x128xf32, #tpu.memory_space<vmem>>, vector<1x64xf32>
    %11 = vector.broadcast %10 : vector<1x64xf32> to vector<8x64xf32>
    %12 = arith.addf %9, %11 : vector<8x64xf32>
    %cst_8 = arith.constant 0.000000e+00 : f32
    %13 = vector.broadcast %cst_8 : f32 to vector<8x64xf32>
    %14 = arith.maximumf %12, %13 : vector<8x64xf32>
    %15 = tpu.iota {dimensions = array<i32: 1>} : vector<1x128xi32>
    %c160 = arith.constant 160 : index
    %c0_9 = arith.constant 0 : index
    %16 = vector.load %arg0[%c160, %c0_9] : memref<312x128xf32, #tpu.memory_space<vmem>>, vector<64x128xf32>
    %cst_10 = arith.constant dense<0.000000e+00> : vector<8x128xf32>
    %17 = tpu.matmul %14, %16, %cst_10 {dimension_numbers = #tpu.dot_dimension_numbers<[1], [0], [0], [1], [0, 0, 1, 1], [], []>} : vector<8x64xf32>, vector<64x128xf32>, vector<8x128xf32> -> vector<8x128xf32>
    %c224 = arith.constant 224 : index
    %c0_11 = arith.constant 0 : index
    %18 = vector.load %arg0[%c224, %c0_11] : memref<312x128xf32, #tpu.memory_space<vmem>>, vector<1x128xf32>
    %19 = vector.broadcast %18 : vector<1x128xf32> to vector<8x128xf32>
    %20 = arith.addf %17, %19 : vector<8x128xf32>
    %c10_i32 = arith.constant 10 : i32
    %21 = vector.broadcast %c10_i32 : i32 to vector<1x128xi32>
    %22 = arith.cmpi slt, %15, %21 : vector<1x128xi32>
    %cst_12 = arith.constant -1.000000e+30 : f32
    %23 = vector.shape_cast %22 : vector<1x128xi1> to vector<1x128xi1>
    %24 = vector.broadcast %23 : vector<1x128xi1> to vector<8x128xi1>
    %25 = vector.broadcast %cst_12 : f32 to vector<8x128xf32>
    %26 = arith.select %24, %20, %25 : vector<8x128xi1>, vector<8x128xf32>
    %cst_13 = arith.constant dense<0xFF800000> : vector<8xf32>
    %27 = vector.multi_reduction <maximumf>, %26, %cst_13 [1] : vector<8x128xf32> to vector<8xf32>
    %28 = vector.shape_cast %27 : vector<8xf32> to vector<8x1xf32>
    %29 = vector.broadcast %28 : vector<8x1xf32> to vector<8x128xf32>
    %30 = arith.subf %26, %29 : vector<8x128xf32>
    %31 = math.exp %30 : vector<8x128xf32>
    %cst_14 = arith.constant dense<0.000000e+00> : vector<8xf32>
    %32 = vector.multi_reduction <add>, %31, %cst_14 [1] : vector<8x128xf32> to vector<8xf32>
    %33 = vector.shape_cast %32 : vector<8xf32> to vector<8x1xf32>
    %34 = vector.broadcast %33 : vector<8x1xf32> to vector<8x128xf32>
    %35 = arith.divf %31, %34 : vector<8x128xf32>
    %36 = tpu.transpose %35, [1, 0] : vector<8x128xf32> -> vector<128x8xf32>
    %37 = vector.extract_strided_slice %36 {offsets = [0, 0], sizes = [10, 8], strides = [1, 1]} : vector<128x8xf32> to vector<10x8xf32>
    %c232 = arith.constant 232 : index
    %c0_15 = arith.constant 0 : index
    %38 = vector.load %arg0[%c232, %c0_15] : memref<312x128xf32, #tpu.memory_space<vmem>>, vector<64x128xf32>
    %cst_16 = arith.constant dense<0.000000e+00> : vector<8x128xf32>
    %39 = tpu.matmul %14, %38, %cst_16 {dimension_numbers = #tpu.dot_dimension_numbers<[1], [0], [0], [1], [0, 0, 1, 1], [], []>} : vector<8x64xf32>, vector<64x128xf32>, vector<8x128xf32> -> vector<8x128xf32>
    %c296 = arith.constant 296 : index
    %c0_17 = arith.constant 0 : index
    %40 = vector.load %arg0[%c296, %c0_17] : memref<312x128xf32, #tpu.memory_space<vmem>>, vector<1x128xf32>
    %41 = vector.broadcast %40 : vector<1x128xf32> to vector<8x128xf32>
    %42 = arith.addf %39, %41 : vector<8x128xf32>
    %43 = vector.extract_strided_slice %42 {offsets = [0, 0], sizes = [8, 8], strides = [1, 1]} : vector<8x128xf32> to vector<8x8xf32>
    %44 = tpu.iota {dimensions = array<i32: 1>} : vector<1x8xi32>
    %45 = tpu.iota {dimensions = array<i32: 0>} : vector<8x1xi32>
    %c0_18 = arith.constant 0 : index
    %c0_19 = arith.constant 0 : index
    %46 = vector.load %arg2[%c0_18, %c0_19] : memref<10x8xf32, #tpu.memory_space<vmem>>, vector<10x8xf32>
    %cst_20 = arith.constant 0.000000e+00 : f32
    %47 = vector.broadcast %cst_20 : f32 to vector<8x8xf32>
    %c0_i32 = arith.constant 0 : i32
    %48 = vector.broadcast %c0_i32 : i32 to vector<1x8xi32>
    %49 = arith.cmpi eq, %44, %48 : vector<1x8xi32>
    %cst_21 = arith.constant 0.000000e+00 : f32
    %50 = vector.shape_cast %49 : vector<1x8xi1> to vector<1x8xi1>
    %51 = vector.broadcast %50 : vector<1x8xi1> to vector<10x8xi1>
    %52 = vector.broadcast %cst_21 : f32 to vector<10x8xf32>
    %53 = arith.select %51, %37, %52 : vector<10x8xi1>, vector<10x8xf32>
    %cst_22 = arith.constant dense<0.000000e+00> : vector<10xf32>
    %54 = vector.multi_reduction <add>, %53, %cst_22 [1] : vector<10x8xf32> to vector<10xf32>
    %55 = vector.shape_cast %54 : vector<10xf32> to vector<10x1xf32>
    %56 = vector.broadcast %c0_i32 : i32 to vector<8x1xi32>
    %57 = arith.cmpi eq, %45, %56 : vector<8x1xi32>
    %cst_23 = arith.constant 0.000000e+00 : f32
    %58 = vector.shape_cast %57 : vector<8x1xi1> to vector<8x1xi1>
    %59 = vector.broadcast %58 : vector<8x1xi1> to vector<8x8xi1>
    %60 = vector.broadcast %cst_23 : f32 to vector<8x8xf32>
    %61 = arith.select %59, %43, %60 : vector<8x8xi1>, vector<8x8xf32>
    %cst_24 = arith.constant dense<0.000000e+00> : vector<8xf32>
    %62 = vector.multi_reduction <add>, %61, %cst_24 [0] : vector<8x8xf32> to vector<8xf32>
    %63 = vector.shape_cast %62 : vector<8xf32> to vector<1x8xf32>
    %64 = vector.broadcast %55 : vector<10x1xf32> to vector<10x8xf32>
    %65 = arith.mulf %46, %64 : vector<10x8xf32>
    %cst_25 = arith.constant dense<0.000000e+00> : vector<8xf32>
    %66 = vector.multi_reduction <add>, %65, %cst_25 [0] : vector<10x8xf32> to vector<8xf32>
    %67 = vector.shape_cast %66 : vector<8xf32> to vector<1x8xf32>
    %cst_26 = arith.constant 1.000000e+00 : f32
    %68 = vector.broadcast %cst_26 : f32 to vector<10x1xf32>
    %69 = arith.subf %68, %55 : vector<10x1xf32>
    %70 = vector.broadcast %69 : vector<10x1xf32> to vector<10x8xf32>
    %71 = arith.mulf %46, %70 : vector<10x8xf32>
    %72 = vector.broadcast %63 : vector<1x8xf32> to vector<10x8xf32>
    %73 = vector.broadcast %55 : vector<10x1xf32> to vector<10x8xf32>
    %74 = arith.mulf %72, %73 : vector<10x8xf32>
    %75 = arith.addf %71, %74 : vector<10x8xf32>
    %76 = vector.broadcast %c0_i32 : i32 to vector<8x1xi32>
    %77 = arith.cmpi eq, %45, %76 : vector<8x1xi32>
    %cst_27 = arith.constant 0.000000e+00 : f32
    %78 = vector.shape_cast %77 : vector<8x1xi1> to vector<8x1xi1>
    %79 = vector.broadcast %78 : vector<8x1xi1> to vector<8x8xi1>
    %80 = vector.shape_cast %67 : vector<1x8xf32> to vector<1x8xf32>
    %81 = vector.broadcast %80 : vector<1x8xf32> to vector<8x8xf32>
    %82 = vector.broadcast %cst_27 : f32 to vector<8x8xf32>
    %83 = arith.select %79, %81, %82 : vector<8x8xi1>, vector<8x8xf32>
    %84 = arith.addf %47, %83 : vector<8x8xf32>
    %c1_i32 = arith.constant 1 : i32
    %85 = vector.broadcast %c1_i32 : i32 to vector<1x8xi32>
    %86 = arith.cmpi eq, %44, %85 : vector<1x8xi32>
    %cst_28 = arith.constant 0.000000e+00 : f32
    %87 = vector.shape_cast %86 : vector<1x8xi1> to vector<1x8xi1>
    %88 = vector.broadcast %87 : vector<1x8xi1> to vector<10x8xi1>
    %89 = vector.broadcast %cst_28 : f32 to vector<10x8xf32>
    %90 = arith.select %88, %37, %89 : vector<10x8xi1>, vector<10x8xf32>
    %cst_29 = arith.constant dense<0.000000e+00> : vector<10xf32>
    %91 = vector.multi_reduction <add>, %90, %cst_29 [1] : vector<10x8xf32> to vector<10xf32>
    %92 = vector.shape_cast %91 : vector<10xf32> to vector<10x1xf32>
    %93 = vector.broadcast %c1_i32 : i32 to vector<8x1xi32>
    %94 = arith.cmpi eq, %45, %93 : vector<8x1xi32>
    %cst_30 = arith.constant 0.000000e+00 : f32
    %95 = vector.shape_cast %94 : vector<8x1xi1> to vector<8x1xi1>
    %96 = vector.broadcast %95 : vector<8x1xi1> to vector<8x8xi1>
    %97 = vector.broadcast %cst_30 : f32 to vector<8x8xf32>
    %98 = arith.select %96, %43, %97 : vector<8x8xi1>, vector<8x8xf32>
    %cst_31 = arith.constant dense<0.000000e+00> : vector<8xf32>
    %99 = vector.multi_reduction <add>, %98, %cst_31 [0] : vector<8x8xf32> to vector<8xf32>
    %100 = vector.shape_cast %99 : vector<8xf32> to vector<1x8xf32>
    %101 = vector.broadcast %92 : vector<10x1xf32> to vector<10x8xf32>
    %102 = arith.mulf %75, %101 : vector<10x8xf32>
    %cst_32 = arith.constant dense<0.000000e+00> : vector<8xf32>
    %103 = vector.multi_reduction <add>, %102, %cst_32 [0] : vector<10x8xf32> to vector<8xf32>
    %104 = vector.shape_cast %103 : vector<8xf32> to vector<1x8xf32>
    %cst_33 = arith.constant 1.000000e+00 : f32
    %105 = vector.broadcast %cst_33 : f32 to vector<10x1xf32>
    %106 = arith.subf %105, %92 : vector<10x1xf32>
    %107 = vector.broadcast %106 : vector<10x1xf32> to vector<10x8xf32>
    %108 = arith.mulf %75, %107 : vector<10x8xf32>
    %109 = vector.broadcast %100 : vector<1x8xf32> to vector<10x8xf32>
    %110 = vector.broadcast %92 : vector<10x1xf32> to vector<10x8xf32>
    %111 = arith.mulf %109, %110 : vector<10x8xf32>
    %112 = arith.addf %108, %111 : vector<10x8xf32>
    %113 = vector.broadcast %c1_i32 : i32 to vector<8x1xi32>
    %114 = arith.cmpi eq, %45, %113 : vector<8x1xi32>
    %cst_34 = arith.constant 0.000000e+00 : f32
    %115 = vector.shape_cast %114 : vector<8x1xi1> to vector<8x1xi1>
    %116 = vector.broadcast %115 : vector<8x1xi1> to vector<8x8xi1>
    %117 = vector.shape_cast %104 : vector<1x8xf32> to vector<1x8xf32>
    %118 = vector.broadcast %117 : vector<1x8xf32> to vector<8x8xf32>
    %119 = vector.broadcast %cst_34 : f32 to vector<8x8xf32>
    %120 = arith.select %116, %118, %119 : vector<8x8xi1>, vector<8x8xf32>
    %121 = arith.addf %84, %120 : vector<8x8xf32>
    %c2_i32 = arith.constant 2 : i32
    %122 = vector.broadcast %c2_i32 : i32 to vector<1x8xi32>
    %123 = arith.cmpi eq, %44, %122 : vector<1x8xi32>
    %cst_35 = arith.constant 0.000000e+00 : f32
    %124 = vector.shape_cast %123 : vector<1x8xi1> to vector<1x8xi1>
    %125 = vector.broadcast %124 : vector<1x8xi1> to vector<10x8xi1>
    %126 = vector.broadcast %cst_35 : f32 to vector<10x8xf32>
    %127 = arith.select %125, %37, %126 : vector<10x8xi1>, vector<10x8xf32>
    %cst_36 = arith.constant dense<0.000000e+00> : vector<10xf32>
    %128 = vector.multi_reduction <add>, %127, %cst_36 [1] : vector<10x8xf32> to vector<10xf32>
    %129 = vector.shape_cast %128 : vector<10xf32> to vector<10x1xf32>
    %130 = vector.broadcast %c2_i32 : i32 to vector<8x1xi32>
    %131 = arith.cmpi eq, %45, %130 : vector<8x1xi32>
    %cst_37 = arith.constant 0.000000e+00 : f32
    %132 = vector.shape_cast %131 : vector<8x1xi1> to vector<8x1xi1>
    %133 = vector.broadcast %132 : vector<8x1xi1> to vector<8x8xi1>
    %134 = vector.broadcast %cst_37 : f32 to vector<8x8xf32>
    %135 = arith.select %133, %43, %134 : vector<8x8xi1>, vector<8x8xf32>
    %cst_38 = arith.constant dense<0.000000e+00> : vector<8xf32>
    %136 = vector.multi_reduction <add>, %135, %cst_38 [0] : vector<8x8xf32> to vector<8xf32>
    %137 = vector.shape_cast %136 : vector<8xf32> to vector<1x8xf32>
    %138 = vector.broadcast %129 : vector<10x1xf32> to vector<10x8xf32>
    %139 = arith.mulf %112, %138 : vector<10x8xf32>
    %cst_39 = arith.constant dense<0.000000e+00> : vector<8xf32>
    %140 = vector.multi_reduction <add>, %139, %cst_39 [0] : vector<10x8xf32> to vector<8xf32>
    %141 = vector.shape_cast %140 : vector<8xf32> to vector<1x8xf32>
    %cst_40 = arith.constant 1.000000e+00 : f32
    %142 = vector.broadcast %cst_40 : f32 to vector<10x1xf32>
    %143 = arith.subf %142, %129 : vector<10x1xf32>
    %144 = vector.broadcast %143 : vector<10x1xf32> to vector<10x8xf32>
    %145 = arith.mulf %112, %144 : vector<10x8xf32>
    %146 = vector.broadcast %137 : vector<1x8xf32> to vector<10x8xf32>
    %147 = vector.broadcast %129 : vector<10x1xf32> to vector<10x8xf32>
    %148 = arith.mulf %146, %147 : vector<10x8xf32>
    %149 = arith.addf %145, %148 : vector<10x8xf32>
    %150 = vector.broadcast %c2_i32 : i32 to vector<8x1xi32>
    %151 = arith.cmpi eq, %45, %150 : vector<8x1xi32>
    %cst_41 = arith.constant 0.000000e+00 : f32
    %152 = vector.shape_cast %151 : vector<8x1xi1> to vector<8x1xi1>
    %153 = vector.broadcast %152 : vector<8x1xi1> to vector<8x8xi1>
    %154 = vector.shape_cast %141 : vector<1x8xf32> to vector<1x8xf32>
    %155 = vector.broadcast %154 : vector<1x8xf32> to vector<8x8xf32>
    %156 = vector.broadcast %cst_41 : f32 to vector<8x8xf32>
    %157 = arith.select %153, %155, %156 : vector<8x8xi1>, vector<8x8xf32>
    %158 = arith.addf %121, %157 : vector<8x8xf32>
    %c3_i32 = arith.constant 3 : i32
    %159 = vector.broadcast %c3_i32 : i32 to vector<1x8xi32>
    %160 = arith.cmpi eq, %44, %159 : vector<1x8xi32>
    %cst_42 = arith.constant 0.000000e+00 : f32
    %161 = vector.shape_cast %160 : vector<1x8xi1> to vector<1x8xi1>
    %162 = vector.broadcast %161 : vector<1x8xi1> to vector<10x8xi1>
    %163 = vector.broadcast %cst_42 : f32 to vector<10x8xf32>
    %164 = arith.select %162, %37, %163 : vector<10x8xi1>, vector<10x8xf32>
    %cst_43 = arith.constant dense<0.000000e+00> : vector<10xf32>
    %165 = vector.multi_reduction <add>, %164, %cst_43 [1] : vector<10x8xf32> to vector<10xf32>
    %166 = vector.shape_cast %165 : vector<10xf32> to vector<10x1xf32>
    %167 = vector.broadcast %c3_i32 : i32 to vector<8x1xi32>
    %168 = arith.cmpi eq, %45, %167 : vector<8x1xi32>
    %cst_44 = arith.constant 0.000000e+00 : f32
    %169 = vector.shape_cast %168 : vector<8x1xi1> to vector<8x1xi1>
    %170 = vector.broadcast %169 : vector<8x1xi1> to vector<8x8xi1>
    %171 = vector.broadcast %cst_44 : f32 to vector<8x8xf32>
    %172 = arith.select %170, %43, %171 : vector<8x8xi1>, vector<8x8xf32>
    %cst_45 = arith.constant dense<0.000000e+00> : vector<8xf32>
    %173 = vector.multi_reduction <add>, %172, %cst_45 [0] : vector<8x8xf32> to vector<8xf32>
    %174 = vector.shape_cast %173 : vector<8xf32> to vector<1x8xf32>
    %175 = vector.broadcast %166 : vector<10x1xf32> to vector<10x8xf32>
    %176 = arith.mulf %149, %175 : vector<10x8xf32>
    %cst_46 = arith.constant dense<0.000000e+00> : vector<8xf32>
    %177 = vector.multi_reduction <add>, %176, %cst_46 [0] : vector<10x8xf32> to vector<8xf32>
    %178 = vector.shape_cast %177 : vector<8xf32> to vector<1x8xf32>
    %cst_47 = arith.constant 1.000000e+00 : f32
    %179 = vector.broadcast %cst_47 : f32 to vector<10x1xf32>
    %180 = arith.subf %179, %166 : vector<10x1xf32>
    %181 = vector.broadcast %180 : vector<10x1xf32> to vector<10x8xf32>
    %182 = arith.mulf %149, %181 : vector<10x8xf32>
    %183 = vector.broadcast %174 : vector<1x8xf32> to vector<10x8xf32>
    %184 = vector.broadcast %166 : vector<10x1xf32> to vector<10x8xf32>
    %185 = arith.mulf %183, %184 : vector<10x8xf32>
    %186 = arith.addf %182, %185 : vector<10x8xf32>
    %187 = vector.broadcast %c3_i32 : i32 to vector<8x1xi32>
    %188 = arith.cmpi eq, %45, %187 : vector<8x1xi32>
    %cst_48 = arith.constant 0.000000e+00 : f32
    %189 = vector.shape_cast %188 : vector<8x1xi1> to vector<8x1xi1>
    %190 = vector.broadcast %189 : vector<8x1xi1> to vector<8x8xi1>
    %191 = vector.shape_cast %178 : vector<1x8xf32> to vector<1x8xf32>
    %192 = vector.broadcast %191 : vector<1x8xf32> to vector<8x8xf32>
    %193 = vector.broadcast %cst_48 : f32 to vector<8x8xf32>
    %194 = arith.select %190, %192, %193 : vector<8x8xi1>, vector<8x8xf32>
    %195 = arith.addf %158, %194 : vector<8x8xf32>
    %c4_i32 = arith.constant 4 : i32
    %196 = vector.broadcast %c4_i32 : i32 to vector<1x8xi32>
    %197 = arith.cmpi eq, %44, %196 : vector<1x8xi32>
    %cst_49 = arith.constant 0.000000e+00 : f32
    %198 = vector.shape_cast %197 : vector<1x8xi1> to vector<1x8xi1>
    %199 = vector.broadcast %198 : vector<1x8xi1> to vector<10x8xi1>
    %200 = vector.broadcast %cst_49 : f32 to vector<10x8xf32>
    %201 = arith.select %199, %37, %200 : vector<10x8xi1>, vector<10x8xf32>
    %cst_50 = arith.constant dense<0.000000e+00> : vector<10xf32>
    %202 = vector.multi_reduction <add>, %201, %cst_50 [1] : vector<10x8xf32> to vector<10xf32>
    %203 = vector.shape_cast %202 : vector<10xf32> to vector<10x1xf32>
    %204 = vector.broadcast %c4_i32 : i32 to vector<8x1xi32>
    %205 = arith.cmpi eq, %45, %204 : vector<8x1xi32>
    %cst_51 = arith.constant 0.000000e+00 : f32
    %206 = vector.shape_cast %205 : vector<8x1xi1> to vector<8x1xi1>
    %207 = vector.broadcast %206 : vector<8x1xi1> to vector<8x8xi1>
    %208 = vector.broadcast %cst_51 : f32 to vector<8x8xf32>
    %209 = arith.select %207, %43, %208 : vector<8x8xi1>, vector<8x8xf32>
    %cst_52 = arith.constant dense<0.000000e+00> : vector<8xf32>
    %210 = vector.multi_reduction <add>, %209, %cst_52 [0] : vector<8x8xf32> to vector<8xf32>
    %211 = vector.shape_cast %210 : vector<8xf32> to vector<1x8xf32>
    %212 = vector.broadcast %203 : vector<10x1xf32> to vector<10x8xf32>
    %213 = arith.mulf %186, %212 : vector<10x8xf32>
    %cst_53 = arith.constant dense<0.000000e+00> : vector<8xf32>
    %214 = vector.multi_reduction <add>, %213, %cst_53 [0] : vector<10x8xf32> to vector<8xf32>
    %215 = vector.shape_cast %214 : vector<8xf32> to vector<1x8xf32>
    %cst_54 = arith.constant 1.000000e+00 : f32
    %216 = vector.broadcast %cst_54 : f32 to vector<10x1xf32>
    %217 = arith.subf %216, %203 : vector<10x1xf32>
    %218 = vector.broadcast %217 : vector<10x1xf32> to vector<10x8xf32>
    %219 = arith.mulf %186, %218 : vector<10x8xf32>
    %220 = vector.broadcast %211 : vector<1x8xf32> to vector<10x8xf32>
    %221 = vector.broadcast %203 : vector<10x1xf32> to vector<10x8xf32>
    %222 = arith.mulf %220, %221 : vector<10x8xf32>
    %223 = arith.addf %219, %222 : vector<10x8xf32>
    %224 = vector.broadcast %c4_i32 : i32 to vector<8x1xi32>
    %225 = arith.cmpi eq, %45, %224 : vector<8x1xi32>
    %cst_55 = arith.constant 0.000000e+00 : f32
    %226 = vector.shape_cast %225 : vector<8x1xi1> to vector<8x1xi1>
    %227 = vector.broadcast %226 : vector<8x1xi1> to vector<8x8xi1>
    %228 = vector.shape_cast %215 : vector<1x8xf32> to vector<1x8xf32>
    %229 = vector.broadcast %228 : vector<1x8xf32> to vector<8x8xf32>
    %230 = vector.broadcast %cst_55 : f32 to vector<8x8xf32>
    %231 = arith.select %227, %229, %230 : vector<8x8xi1>, vector<8x8xf32>
    %232 = arith.addf %195, %231 : vector<8x8xf32>
    %c5_i32 = arith.constant 5 : i32
    %233 = vector.broadcast %c5_i32 : i32 to vector<1x8xi32>
    %234 = arith.cmpi eq, %44, %233 : vector<1x8xi32>
    %cst_56 = arith.constant 0.000000e+00 : f32
    %235 = vector.shape_cast %234 : vector<1x8xi1> to vector<1x8xi1>
    %236 = vector.broadcast %235 : vector<1x8xi1> to vector<10x8xi1>
    %237 = vector.broadcast %cst_56 : f32 to vector<10x8xf32>
    %238 = arith.select %236, %37, %237 : vector<10x8xi1>, vector<10x8xf32>
    %cst_57 = arith.constant dense<0.000000e+00> : vector<10xf32>
    %239 = vector.multi_reduction <add>, %238, %cst_57 [1] : vector<10x8xf32> to vector<10xf32>
    %240 = vector.shape_cast %239 : vector<10xf32> to vector<10x1xf32>
    %241 = vector.broadcast %c5_i32 : i32 to vector<8x1xi32>
    %242 = arith.cmpi eq, %45, %241 : vector<8x1xi32>
    %cst_58 = arith.constant 0.000000e+00 : f32
    %243 = vector.shape_cast %242 : vector<8x1xi1> to vector<8x1xi1>
    %244 = vector.broadcast %243 : vector<8x1xi1> to vector<8x8xi1>
    %245 = vector.broadcast %cst_58 : f32 to vector<8x8xf32>
    %246 = arith.select %244, %43, %245 : vector<8x8xi1>, vector<8x8xf32>
    %cst_59 = arith.constant dense<0.000000e+00> : vector<8xf32>
    %247 = vector.multi_reduction <add>, %246, %cst_59 [0] : vector<8x8xf32> to vector<8xf32>
    %248 = vector.shape_cast %247 : vector<8xf32> to vector<1x8xf32>
    %249 = vector.broadcast %240 : vector<10x1xf32> to vector<10x8xf32>
    %250 = arith.mulf %223, %249 : vector<10x8xf32>
    %cst_60 = arith.constant dense<0.000000e+00> : vector<8xf32>
    %251 = vector.multi_reduction <add>, %250, %cst_60 [0] : vector<10x8xf32> to vector<8xf32>
    %252 = vector.shape_cast %251 : vector<8xf32> to vector<1x8xf32>
    %cst_61 = arith.constant 1.000000e+00 : f32
    %253 = vector.broadcast %cst_61 : f32 to vector<10x1xf32>
    %254 = arith.subf %253, %240 : vector<10x1xf32>
    %255 = vector.broadcast %254 : vector<10x1xf32> to vector<10x8xf32>
    %256 = arith.mulf %223, %255 : vector<10x8xf32>
    %257 = vector.broadcast %248 : vector<1x8xf32> to vector<10x8xf32>
    %258 = vector.broadcast %240 : vector<10x1xf32> to vector<10x8xf32>
    %259 = arith.mulf %257, %258 : vector<10x8xf32>
    %260 = arith.addf %256, %259 : vector<10x8xf32>
    %261 = vector.broadcast %c5_i32 : i32 to vector<8x1xi32>
    %262 = arith.cmpi eq, %45, %261 : vector<8x1xi32>
    %cst_62 = arith.constant 0.000000e+00 : f32
    %263 = vector.shape_cast %262 : vector<8x1xi1> to vector<8x1xi1>
    %264 = vector.broadcast %263 : vector<8x1xi1> to vector<8x8xi1>
    %265 = vector.shape_cast %252 : vector<1x8xf32> to vector<1x8xf32>
    %266 = vector.broadcast %265 : vector<1x8xf32> to vector<8x8xf32>
    %267 = vector.broadcast %cst_62 : f32 to vector<8x8xf32>
    %268 = arith.select %264, %266, %267 : vector<8x8xi1>, vector<8x8xf32>
    %269 = arith.addf %232, %268 : vector<8x8xf32>
    %c6_i32 = arith.constant 6 : i32
    %270 = vector.broadcast %c6_i32 : i32 to vector<1x8xi32>
    %271 = arith.cmpi eq, %44, %270 : vector<1x8xi32>
    %cst_63 = arith.constant 0.000000e+00 : f32
    %272 = vector.shape_cast %271 : vector<1x8xi1> to vector<1x8xi1>
    %273 = vector.broadcast %272 : vector<1x8xi1> to vector<10x8xi1>
    %274 = vector.broadcast %cst_63 : f32 to vector<10x8xf32>
    %275 = arith.select %273, %37, %274 : vector<10x8xi1>, vector<10x8xf32>
    %cst_64 = arith.constant dense<0.000000e+00> : vector<10xf32>
    %276 = vector.multi_reduction <add>, %275, %cst_64 [1] : vector<10x8xf32> to vector<10xf32>
    %277 = vector.shape_cast %276 : vector<10xf32> to vector<10x1xf32>
    %278 = vector.broadcast %c6_i32 : i32 to vector<8x1xi32>
    %279 = arith.cmpi eq, %45, %278 : vector<8x1xi32>
    %cst_65 = arith.constant 0.000000e+00 : f32
    %280 = vector.shape_cast %279 : vector<8x1xi1> to vector<8x1xi1>
    %281 = vector.broadcast %280 : vector<8x1xi1> to vector<8x8xi1>
    %282 = vector.broadcast %cst_65 : f32 to vector<8x8xf32>
    %283 = arith.select %281, %43, %282 : vector<8x8xi1>, vector<8x8xf32>
    %cst_66 = arith.constant dense<0.000000e+00> : vector<8xf32>
    %284 = vector.multi_reduction <add>, %283, %cst_66 [0] : vector<8x8xf32> to vector<8xf32>
    %285 = vector.shape_cast %284 : vector<8xf32> to vector<1x8xf32>
    %286 = vector.broadcast %277 : vector<10x1xf32> to vector<10x8xf32>
    %287 = arith.mulf %260, %286 : vector<10x8xf32>
    %cst_67 = arith.constant dense<0.000000e+00> : vector<8xf32>
    %288 = vector.multi_reduction <add>, %287, %cst_67 [0] : vector<10x8xf32> to vector<8xf32>
    %289 = vector.shape_cast %288 : vector<8xf32> to vector<1x8xf32>
    %cst_68 = arith.constant 1.000000e+00 : f32
    %290 = vector.broadcast %cst_68 : f32 to vector<10x1xf32>
    %291 = arith.subf %290, %277 : vector<10x1xf32>
    %292 = vector.broadcast %291 : vector<10x1xf32> to vector<10x8xf32>
    %293 = arith.mulf %260, %292 : vector<10x8xf32>
    %294 = vector.broadcast %285 : vector<1x8xf32> to vector<10x8xf32>
    %295 = vector.broadcast %277 : vector<10x1xf32> to vector<10x8xf32>
    %296 = arith.mulf %294, %295 : vector<10x8xf32>
    %297 = arith.addf %293, %296 : vector<10x8xf32>
    %298 = vector.broadcast %c6_i32 : i32 to vector<8x1xi32>
    %299 = arith.cmpi eq, %45, %298 : vector<8x1xi32>
    %cst_69 = arith.constant 0.000000e+00 : f32
    %300 = vector.shape_cast %299 : vector<8x1xi1> to vector<8x1xi1>
    %301 = vector.broadcast %300 : vector<8x1xi1> to vector<8x8xi1>
    %302 = vector.shape_cast %289 : vector<1x8xf32> to vector<1x8xf32>
    %303 = vector.broadcast %302 : vector<1x8xf32> to vector<8x8xf32>
    %304 = vector.broadcast %cst_69 : f32 to vector<8x8xf32>
    %305 = arith.select %301, %303, %304 : vector<8x8xi1>, vector<8x8xf32>
    %306 = arith.addf %269, %305 : vector<8x8xf32>
    %c7_i32 = arith.constant 7 : i32
    %307 = vector.broadcast %c7_i32 : i32 to vector<1x8xi32>
    %308 = arith.cmpi eq, %44, %307 : vector<1x8xi32>
    %cst_70 = arith.constant 0.000000e+00 : f32
    %309 = vector.shape_cast %308 : vector<1x8xi1> to vector<1x8xi1>
    %310 = vector.broadcast %309 : vector<1x8xi1> to vector<10x8xi1>
    %311 = vector.broadcast %cst_70 : f32 to vector<10x8xf32>
    %312 = arith.select %310, %37, %311 : vector<10x8xi1>, vector<10x8xf32>
    %cst_71 = arith.constant dense<0.000000e+00> : vector<10xf32>
    %313 = vector.multi_reduction <add>, %312, %cst_71 [1] : vector<10x8xf32> to vector<10xf32>
    %314 = vector.shape_cast %313 : vector<10xf32> to vector<10x1xf32>
    %315 = vector.broadcast %c7_i32 : i32 to vector<8x1xi32>
    %316 = arith.cmpi eq, %45, %315 : vector<8x1xi32>
    %cst_72 = arith.constant 0.000000e+00 : f32
    %317 = vector.shape_cast %316 : vector<8x1xi1> to vector<8x1xi1>
    %318 = vector.broadcast %317 : vector<8x1xi1> to vector<8x8xi1>
    %319 = vector.broadcast %cst_72 : f32 to vector<8x8xf32>
    %320 = arith.select %318, %43, %319 : vector<8x8xi1>, vector<8x8xf32>
    %cst_73 = arith.constant dense<0.000000e+00> : vector<8xf32>
    %321 = vector.multi_reduction <add>, %320, %cst_73 [0] : vector<8x8xf32> to vector<8xf32>
    %322 = vector.shape_cast %321 : vector<8xf32> to vector<1x8xf32>
    %323 = vector.broadcast %314 : vector<10x1xf32> to vector<10x8xf32>
    %324 = arith.mulf %297, %323 : vector<10x8xf32>
    %cst_74 = arith.constant dense<0.000000e+00> : vector<8xf32>
    %325 = vector.multi_reduction <add>, %324, %cst_74 [0] : vector<10x8xf32> to vector<8xf32>
    %326 = vector.shape_cast %325 : vector<8xf32> to vector<1x8xf32>
    %cst_75 = arith.constant 1.000000e+00 : f32
    %327 = vector.broadcast %cst_75 : f32 to vector<10x1xf32>
    %328 = arith.subf %327, %314 : vector<10x1xf32>
    %329 = vector.broadcast %328 : vector<10x1xf32> to vector<10x8xf32>
    %330 = arith.mulf %297, %329 : vector<10x8xf32>
    %331 = vector.broadcast %322 : vector<1x8xf32> to vector<10x8xf32>
    %332 = vector.broadcast %314 : vector<10x1xf32> to vector<10x8xf32>
    %333 = arith.mulf %331, %332 : vector<10x8xf32>
    %334 = arith.addf %330, %333 : vector<10x8xf32>
    %335 = vector.broadcast %c7_i32 : i32 to vector<8x1xi32>
    %336 = arith.cmpi eq, %45, %335 : vector<8x1xi32>
    %cst_76 = arith.constant 0.000000e+00 : f32
    %337 = vector.shape_cast %336 : vector<8x1xi1> to vector<8x1xi1>
    %338 = vector.broadcast %337 : vector<8x1xi1> to vector<8x8xi1>
    %339 = vector.shape_cast %326 : vector<1x8xf32> to vector<1x8xf32>
    %340 = vector.broadcast %339 : vector<1x8xf32> to vector<8x8xf32>
    %341 = vector.broadcast %cst_76 : f32 to vector<8x8xf32>
    %342 = arith.select %338, %340, %341 : vector<8x8xi1>, vector<8x8xf32>
    %343 = arith.addf %306, %342 : vector<8x8xf32>
    %c8_i32 = arith.constant 8 : i32
    %c304 = arith.constant 304 : index
    %c0_77 = arith.constant 0 : index
    %344 = vector.load %arg0[%c304, %c0_77] : memref<312x128xf32, #tpu.memory_space<vmem>>, vector<8x128xf32>
    %cst_78 = arith.constant dense<0.000000e+00> : vector<8x128xf32>
    %345 = tpu.matmul %343, %344, %cst_78 {dimension_numbers = #tpu.dot_dimension_numbers<[1], [0], [0], [1], [0, 0, 1, 1], [], []>} : vector<8x8xf32>, vector<8x128xf32>, vector<8x128xf32> -> vector<8x128xf32>
    %346 = arith.addf %42, %345 : vector<8x128xf32>
    %c0_79 = arith.constant 0 : index
    %c0_80 = arith.constant 0 : index
    %347 = vector.load %arg3[%c0_79, %c0_80] : memref<8x128xf32, #tpu.memory_space<vmem>>, vector<8x128xf32>
    tpu.vector_store %arg3[%c0_79, %c0_80], %346 {strides = array<i32>} : memref<8x128xf32, #tpu.memory_space<vmem>>, vector<8x128xf32>,
    %c0_81 = arith.constant 0 : index
    %c0_82 = arith.constant 0 : index
    %348 = vector.load %arg4[%c0_81, %c0_82] : memref<10x8xf32, #tpu.memory_space<vmem>>, vector<10x8xf32>
    tpu.vector_store %arg4[%c0_81, %c0_82], %334 {strides = array<i32>} : memref<10x8xf32, #tpu.memory_space<vmem>>, vector<10x8xf32>,
    return
  }
}

</mosaic_0001>

<llo_original>
// kernel: tpu_custom_call.1
$region0: #{tpu_custom_call.1}
  #allocation0 [shape = 'u32[]', space=smem, size = 0x4, offset = 0x4, fixed_abs, tag = 'smem constant byte address 0x4 - core index']
  #allocation1 [shape = 'u32[144,128]{1,0:T(1,128)}', space=vmem, size = 0x12000, scoped, tag = 'internal scratch']
  %s0 = inlined_call_operand.hbm [shape: f32[312,128], index: 0, kind: input, shape index: {}]
  %s1 = inlined_call_operand.vmem [shape: f32[8,16], index: 1, kind: input, shape index: {}]
  %s2 = inlined_call_operand.vmem [shape: f32[10,8], index: 2, kind: input, shape index: {}]
  %s3 = inlined_call_operand.hbm [shape: f32[8,128], index: 3, kind: output, shape index: {0}]
  %s4 = inlined_call_operand.vmem [shape: f32[10,8], index: 4, kind: output, shape index: {1}]
  %5 = xla_tuple %s3, %s4
  %s6 = sld [smem:[#allocation0]]
  $region34: #{tpu_custom_call.1} parent=0
    _
  %s8 = ssub.s32 1, %s6
  %s9 = scalar_select 0, %s8, %s6
  $region1: #{tpu_custom_call.1} parent=0
    #allocation2 [shape = 'u8[159744]{0}', space=vmem, size = 0x27000, scoped, tag = 'input window, operand 0, single buffered']
    #allocation3 [shape = 's32[1]{0}', space=sflag, size = 0x4, scoped, tag = 'scoped memory for tpu_custom_call.1']
    #allocation4 [shape = 's32[1]{0}', space=sflag, size = 0x4, scoped, tag = 'scoped memory for tpu_custom_call.1']
    #allocation5 [shape = 'u8[4096]{0}', space=vmem, size = 0x1000, scoped, tag = 'output window, operand 0, single buffered']
    %10 = vsyncpa [#allocation3], 0
    %11 = vsyncpa [#allocation4], 0
    // Predicated region
    $region2: #{tpu_custom_call.1} parent=1 // pred_check
      _
    $region3: #{tpu_custom_call.1} parent=1 // pred_check_branch
      %13 = sbr.rel (0) target = $region5
    $region4: #{tpu_custom_call.1} parent=1 // pred_region
      %s15 = ssub.s32 4992, 4992
      %16 = vsyncadd [#allocation3], %s15
      %s17 = sshll.u32 [#allocation2], 4
      %s18 = int_to_ptr.vmem [resolvable:$true] %s17
      %23 = dma.hbm_to_vmem [thread:$0]  %s0, 4992, %s18, [#allocation3], 128, 128, 8
    $region5: #{tpu_custom_call.1} parent=1 // pred_fallthru
      _
    // Predicated region
    $region6: #{tpu_custom_call.1} parent=1 // pred_check
      _
    $region7: #{tpu_custom_call.1} parent=1 // pred_check_branch
      %25 = sbr.rel (0) target = $region9
    $region8: #{tpu_custom_call.1} parent=1 // pred_region
      _
    $region9: #{tpu_custom_call.1} parent=1 // pred_fallthru
      _
    // Predicated region
    $region10: #{tpu_custom_call.1} parent=1 // pred_check
      _
    $region11: #{tpu_custom_call.1} parent=1 // pred_check_branch
      %27 = sbr.rel (0) target = $region13
    $region12: #{tpu_custom_call.1} parent=1 // pred_region
      _
    $region13: #{tpu_custom_call.1} parent=1 // pred_fallthru
      _
    // Predicated region
    $region14: #{tpu_custom_call.1} parent=1 // pred_check
      _
    $region15: #{tpu_custom_call.1} parent=1 // pred_check_branch
      %29 = sbr.rel (0) target = $region17
    $region16: #{tpu_custom_call.1} parent=1 // pred_region
      %30 = dma.done [#allocation3], 4992
    $region17: #{tpu_custom_call.1} parent=1 // pred_fallthru
      _
    %v31 = vld [vmem:[%s1] sm:$0xff]
    %v32 = vld [vmem:[#allocation2] sm:$0xff]
    %v33 = vld [vmem:[#allocation2 + $0x8] sm:$0xff]
    %v34 = vld [vmem:[#allocation2 + $0x10] sm:$0x1]
    %v35 = vlaneseq
    %v36 = vshrl.u32 %v35, 7
    %v37 = vsub.s32 0, %v36
    %v38 = vrot.slane %v34, %v37
    %vm39 = vcmask 130048
    %v41 = vsel %vm39, %v31, 0
    %43 = vmatprep.subr.mxu0 0.0
    %44 = vmatpush1.msra.mxu0 %v32
    %45 = vmatprep.subr.mxu0 0.0
    %46 = vmatpush1.msra.mxu0 %v33
    %47 = vmatprep.subr.mxu0 0.0
    %48 = vmatpush1.msra.mxu0 0.0
    %49 = vmatprep.subr.mxu0 0.0
    %50 = vmatpush1.msra.mxu0 0.0
    %51 = vmatprep.subr.mxu0 0.0
    %52 = vmatpush1.msra.mxu0 0.0
    %53 = vmatprep.subr.mxu0 0.0
    %54 = vmatpush1.msra.mxu0 0.0
    %55 = vmatprep.subr.mxu0 0.0
    %56 = vmatpush1.msra.mxu0 0.0
    %57 = vmatprep.subr.mxu0 0.0
    %58 = vmatpush1.msra.mxu0 0.0
    %59 = vmatprep.subr.mxu0 0.0
    %60 = vmatpush1.msra.mxu0 0.0
    %61 = vmatprep.subr.mxu0 0.0
    %62 = vmatpush1.msra.mxu0 0.0
    %63 = vmatprep.subr.mxu0 0.0
    %64 = vmatpush1.msra.mxu0 0.0
    %65 = vmatprep.subr.mxu0 0.0
    %66 = vmatpush1.msra.mxu0 0.0
    %67 = vmatprep.subr.mxu0 0.0
    %68 = vmatpush1.msra.mxu0 0.0
    %69 = vmatprep.subr.mxu0 0.0
    %70 = vmatpush1.msra.mxu0 0.0
    %71 = vmatprep.subr.mxu0 0.0
    %72 = vmatpush1.msra.mxu0 0.0
    %73 = vmatprep.subr.mxu0 0.0
    %74 = vmatpush1.msra.mxu0 0.0
    %75 = vmatprep.subr.mxu0 0.0
    %76 = vmatpush1.msra.mxu0 0.0
    %77 = vmatprep.subr.mxu0 0.0
    %78 = vmatpush1.msra.mxu0 0.0
    %79 = vmatprep.subr.mxu0 0.0
    %80 = vmatpush1.msra.mxu0 0.0
    %81 = vmatprep.subr.mxu0 0.0
    %82 = vmatpush1.msra.mxu0 0.0
    %83 = vmatprep.subr.mxu0 0.0
    %84 = vmatpush1.msra.mxu0 0.0
    %85 = vmatprep.subr.mxu0 0.0
    %86 = vmatpush1.msra.mxu0 0.0
    %87 = vmatprep.subr.mxu0 0.0
    %88 = vmatpush1.msra.mxu0 0.0
    %89 = vmatprep.subr.mxu0 0.0
    %90 = vmatpush1.msra.mxu0 0.0
    %91 = vmatprep.subr.mxu0 0.0
    %92 = vmatpush1.msra.mxu0 0.0
    %93 = vmatprep.subr.mxu0 0.0
    %94 = vmatpush1.msra.mxu0 0.0
    %95 = vmatprep.subr.mxu0 0.0
    %96 = vmatpush1.msra.mxu0 0.0
    %97 = vmatprep.subr.mxu0 0.0
    %98 = vmatpush1.msra.mxu0 0.0
    %99 = vmatprep.subr.mxu0 0.0
    %100 = vmatpush1.msra.mxu0 0.0
    %101 = vmatprep.subr.mxu0 0.0
    %102 = vmatpush1.msra.mxu0 0.0
    %103 = vmatprep.subr.mxu0 0.0
    %104 = vmatpush1.msra.mxu0 0.0
    %105 = vmatprep.subr.mxu0 0.0
    %106 = vmatpush1.msra.mxu0 0.0
    %107 = vmatprep.mubr.f32.mxu0 0.0
    %108 = vmatmul.mubr.f32.gmra.mrb[0].mxu0 %v41
    %v109 = vpop.f32.mrb[0].mxu0
    %v110 = vadd.f32 %v38, %v109
    %v111 = vpop.f32.mrb[0].mxu0
    %112 = vdwg.mxu0
    %v113 = vmax.f32 %v110, 0.0
    %v114 = vld [vmem:[#allocation2 + $0x18] sm:$0xff]
    %v115 = vld [vmem:[#allocation2 + $0x20] sm:$0xff]
    %v116 = vld [vmem:[#allocation2 + $0x28] sm:$0xff]
    %v117 = vld [vmem:[#allocation2 + $0x30] sm:$0xff]
    %v118 = vld [vmem:[#allocation2 + $0x38] sm:$0xff]
    %v119 = vld [vmem:[#allocation2 + $0x40] sm:$0xff]
    %v120 = vld [vmem:[#allocation2 + $0x48] sm:$0xff]
    %v121 = vld [vmem:[#allocation2 + $0x50] sm:$0xff]
    %v122 = vld [vmem:[#allocation2 + $0x58] sm:$0xff]
    %v123 = vld [vmem:[#allocation2 + $0x60] sm:$0xff]
    %v124 = vld [vmem:[#allocation2 + $0x68] sm:$0xff]
    %v125 = vld [vmem:[#allocation2 + $0x70] sm:$0xff]
    %v126 = vld [vmem:[#allocation2 + $0x78] sm:$0xff]
    %v127 = vld [vmem:[#allocation2 + $0x80] sm:$0xff]
    %v128 = vld [vmem:[#allocation2 + $0x88] sm:$0xff]
    %v129 = vld [vmem:[#allocation2 + $0x90] sm:$0xff]
    %v130 = vld [vmem:[#allocation2 + $0x98] sm:$0x1]
    %v131 = vlaneseq
    %v132 = vshrl.u32 %v131, 7
    %v133 = vsub.s32 0, %v132
    %v134 = vrot.slane %v130, %v133
    %135 = vmatprep.subr.mxu0 0.0
    %136 = vmatpush1.msra.mxu0 %v114
    %137 = vmatprep.subr.mxu0 0.0
    %138 = vmatpush1.msra.mxu0 %v115
    %139 = vmatprep.subr.mxu0 0.0
    %140 = vmatpush1.msra.mxu0 %v116
    %141 = vmatprep.subr.mxu0 0.0
    %142 = vmatpush1.msra.mxu0 %v117
    %143 = vmatprep.subr.mxu0 0.0
    %144 = vmatpush1.msra.mxu0 %v118
    %145 = vmatprep.subr.mxu0 0.0
    %146 = vmatpush1.msra.mxu0 %v119
    %147 = vmatprep.subr.mxu0 0.0
    %148 = vmatpush1.msra.mxu0 %v120
    %149 = vmatprep.subr.mxu0 0.0
    %150 = vmatpush1.msra.mxu0 %v121
    %151 = vmatprep.subr.mxu0 0.0
    %152 = vmatpush1.msra.mxu0 %v122
    %153 = vmatprep.subr.mxu0 0.0
    %154 = vmatpush1.msra.mxu0 %v123
    %155 = vmatprep.subr.mxu0 0.0
    %156 = vmatpush1.msra.mxu0 %v124
    %157 = vmatprep.subr.mxu0 0.0
    %158 = vmatpush1.msra.mxu0 %v125
    %159 = vmatprep.subr.mxu0 0.0
    %160 = vmatpush1.msra.mxu0 %v126
    %161 = vmatprep.subr.mxu0 0.0
    %162 = vmatpush1.msra.mxu0 %v127
    %163 = vmatprep.subr.mxu0 0.0
    %164 = vmatpush1.msra.mxu0 %v128
    %165 = vmatprep.subr.mxu0 0.0
    %166 = vmatpush1.msra.mxu0 %v129
    %167 = vmatprep.subr.mxu0 0.0
    %168 = vmatpush1.msra.mxu0 0.0
    %169 = vmatprep.subr.mxu0 0.0
    %170 = vmatpush1.msra.mxu0 0.0
    %171 = vmatprep.subr.mxu0 0.0
    %172 = vmatpush1.msra.mxu0 0.0
    %173 = vmatprep.subr.mxu0 0.0
    %174 = vmatpush1.msra.mxu0 0.0
    %175 = vmatprep.subr.mxu0 0.0
    %176 = vmatpush1.msra.mxu0 0.0
    %177 = vmatprep.subr.mxu0 0.0
    %178 = vmatpush1.msra.mxu0 0.0
    %179 = vmatprep.subr.mxu0 0.0
    %180 = vmatpush1.msra.mxu0 0.0
    %181 = vmatprep.subr.mxu0 0.0
    %182 = vmatpush1.msra.mxu0 0.0
    %183 = vmatprep.subr.mxu0 0.0
    %184 = vmatpush1.msra.mxu0 0.0
    %185 = vmatprep.subr.mxu0 0.0
    %186 = vmatpush1.msra.mxu0 0.0
    %187 = vmatprep.subr.mxu0 0.0
    %188 = vmatpush1.msra.mxu0 0.0
    %189 = vmatprep.subr.mxu0 0.0
    %190 = vmatpush1.msra.mxu0 0.0
    %191 = vmatprep.subr.mxu0 0.0
    %192 = vmatpush1.msra.mxu0 0.0
    %193 = vmatprep.subr.mxu0 0.0
    %194 = vmatpush1.msra.mxu0 0.0
    %195 = vmatprep.subr.mxu0 0.0
    %196 = vmatpush1.msra.mxu0 0.0
    %197 = vmatprep.subr.mxu0 0.0
    %198 = vmatpush1.msra.mxu0 0.0
    %199 = vmatprep.mubr.f32.mxu0 0.0
    %200 = vmatmul.mubr.f32.gmra.mrb[0].mxu0 %v113
    %v201 = vpop.f32.mrb[0].mxu0
    %v202 = vadd.f32 %v134, %v201
    %v203 = vpop.f32.mrb[0].mxu0
    %204 = vdwg.mxu0
    %v205 = vmax.f32 %v202, 0.0
    %v206 = vlaneseq
    %v207 = vand.u32 %v206, 127
    %v208 = vld [vmem:[#allocation2 + $0xa0] sm:$0xff]
    %v209 = vld [vmem:[#allocation2 + $0xa8] sm:$0xff]
    %v210 = vld [vmem:[#allocation2 + $0xb0] sm:$0xff]
    %v211 = vld [vmem:[#allocation2 + $0xb8] sm:$0xff]
    %v212 = vld [vmem:[#allocation2 + $0xc0] sm:$0xff]
    %v213 = vld [vmem:[#allocation2 + $0xc8] sm:$0xff]
    %v214 = vld [vmem:[#allocation2 + $0xd0] sm:$0xff]
    %v215 = vld [vmem:[#allocation2 + $0xd8] sm:$0xff]
    %v216 = vld [vmem:[#allocation2 + $0xe0] sm:$0x1]
    %v217 = vlaneseq
    %v218 = vshrl.u32 %v217, 7
    %v219 = vsub.s32 0, %v218
    %v220 = vrot.slane %v216, %v219
    %vm221 = vcmask 523264
    %v223 = vsel %vm221, %v205, 0
    %225 = vmatprep.subr.mxu0 0.0
    %226 = vmatpush1.msra.mxu0 %v208
    %227 = vmatprep.subr.mxu0 0.0
    %228 = vmatpush1.msra.mxu0 %v209
    %229 = vmatprep.subr.mxu0 0.0
    %230 = vmatpush1.msra.mxu0 %v210
    %231 = vmatprep.subr.mxu0 0.0
    %232 = vmatpush1.msra.mxu0 %v211
    %233 = vmatprep.subr.mxu0 0.0
    %234 = vmatpush1.msra.mxu0 %v212
    %235 = vmatprep.subr.mxu0 0.0
    %236 = vmatpush1.msra.mxu0 %v213
    %237 = vmatprep.subr.mxu0 0.0
    %238 = vmatpush1.msra.mxu0 %v214
    %239 = vmatprep.subr.mxu0 0.0
    %240 = vmatpush1.msra.mxu0 %v215
    %241 = vmatprep.subr.mxu0 0.0
    %242 = vmatpush1.msra.mxu0 0.0
    %243 = vmatprep.subr.mxu0 0.0
    %244 = vmatpush1.msra.mxu0 0.0
    %245 = vmatprep.subr.mxu0 0.0
    %246 = vmatpush1.msra.mxu0 0.0
    %247 = vmatprep.subr.mxu0 0.0
    %248 = vmatpush1.msra.mxu0 0.0
    %249 = vmatprep.subr.mxu0 0.0
    %250 = vmatpush1.msra.mxu0 0.0
    %251 = vmatprep.subr.mxu0 0.0
    %252 = vmatpush1.msra.mxu0 0.0
    %253 = vmatprep.subr.mxu0 0.0
    %254 = vmatpush1.msra.mxu0 0.0
    %255 = vmatprep.subr.mxu0 0.0
    %256 = vmatpush1.msra.mxu0 0.0
    %257 = vmatprep.subr.mxu0 0.0
    %258 = vmatpush1.msra.mxu0 0.0
    %259 = vmatprep.subr.mxu0 0.0
    %260 = vmatpush1.msra.mxu0 0.0
    %261 = vmatprep.subr.mxu0 0.0
    %262 = vmatpush1.msra.mxu0 0.0
    %263 = vmatprep.subr.mxu0 0.0
    %264 = vmatpush1.msra.mxu0 0.0
    %265 = vmatprep.subr.mxu0 0.0
    %266 = vmatpush1.msra.mxu0 0.0
    %267 = vmatprep.subr.mxu0 0.0
    %268 = vmatpush1.msra.mxu0 0.0
    %269 = vmatprep.subr.mxu0 0.0
    %270 = vmatpush1.msra.mxu0 0.0
    %271 = vmatprep.subr.mxu0 0.0
    %272 = vmatpush1.msra.mxu0 0.0
    %273 = vmatprep.subr.mxu0 0.0
    %274 = vmatpush1.msra.mxu0 0.0
    %275 = vmatprep.subr.mxu0 0.0
    %276 = vmatpush1.msra.mxu0 0.0
    %277 = vmatprep.subr.mxu0 0.0
    %278 = vmatpush1.msra.mxu0 0.0
    %279 = vmatprep.subr.mxu0 0.0
    %280 = vmatpush1.msra.mxu0 0.0
    %281 = vmatprep.subr.mxu0 0.0
    %282 = vmatpush1.msra.mxu0 0.0
    %283 = vmatprep.subr.mxu0 0.0
    %284 = vmatpush1.msra.mxu0 0.0
    %285 = vmatprep.subr.mxu0 0.0
    %286 = vmatpush1.msra.mxu0 0.0
    %287 = vmatprep.subr.mxu0 0.0
    %288 = vmatpush1.msra.mxu0 0.0
    %289 = vmatprep.mubr.f32.mxu0 0.0
    %290 = vmatmul.mubr.f32.gmra.mrb[0].mxu0 %v223
    %v291 = vpop.f32.mrb[0].mxu0
    %v292 = vadd.f32 %v220, %v291
    %v293 = vpop.f32.mrb[0].mxu0
    %294 = vdwg.mxu0
    %vm295 = vcmp.lt.s32.totalorder %v207, 10
    %v296 = vsel %vm295, 1, 0
    %vm297 = vcmp.eq.s32.totalorder %v296, 1
    %v298 = vsel %vm297, %v292, -1e+30
    %299 = vmax.xlane.f32.xlu0 %v298
    %v300 = vpop.xlane.xlu0 %299
    %v301 = vsub.f32 %v298, %v300
    %v302 = vmul.f32 %v301, 1.442695
    %v303 = vpow.pop %v302
    %304 = vadd.xlane.f32.xlu0 %v303
    %v305 = vpop.xlane.xlu0 %304
    %v306 = vrcp.pop %v305
    %v307 = vmul.f32 %v303, %v306
    %308 = vxpose.xlu0.b32.start [1/16] %v307, 128
    %309 = vxpose.xlu0.b32.cont [2/16] 0.0, 128
    %310 = vxpose.xlu0.b32.cont [3/16] 0.0, 128
    %311 = vxpose.xlu0.b32.cont [4/16] 0.0, 128
    %312 = vxpose.xlu0.b32.cont [5/16] 0.0, 128
    %313 = vxpose.xlu0.b32.cont [6/16] 0.0, 128
    %314 = vxpose.xlu0.b32.cont [7/16] 0.0, 128
    %315 = vxpose.xlu0.b32.cont [8/16] 0.0, 128
    %316 = vxpose.xlu0.b32.cont [9/16] 0.0, 128
    %317 = vxpose.xlu0.b32.cont [10/16] 0.0, 128
    %318 = vxpose.xlu0.b32.cont [11/16] 0.0, 128
    %319 = vxpose.xlu0.b32.cont [12/16] 0.0, 128
    %320 = vxpose.xlu0.b32.cont [13/16] 0.0, 128
    %321 = vxpose.xlu0.b32.cont [14/16] 0.0, 128
    %322 = vxpose.xlu0.b32.cont [15/16] 0.0, 128
    %323 = vxpose.xlu0.b32.end [16/16] 0.0, 128
    %v324 = vpop.trf.xlu0
    %v325 = vpop.trf.xlu0
    %v326 = vpop.trf.xlu0
    %v327 = vpop.trf.xlu0
    %v328 = vpop.trf.xlu0
    %v329 = vpop.trf.xlu0
    %v330 = vpop.trf.xlu0
    %v331 = vpop.trf.xlu0
    %v332 = vpop.trf.xlu0
    %v333 = vpop.trf.xlu0
    %v334 = vpop.trf.xlu0
    %v335 = vpop.trf.xlu0
    %v336 = vpop.trf.xlu0
    %v337 = vpop.trf.xlu0
    %v338 = vpop.trf.xlu0
    %v339 = vpop.trf.xlu0
    %v340 = vld [vmem:[#allocation2 + $0xe8] sm:$0xff]
    %v341 = vld [vmem:[#allocation2 + $0xf0] sm:$0xff]
    %v342 = vld [vmem:[#allocation2 + $0xf8] sm:$0xff]
    %v343 = vld [vmem:[#allocation2 + $0x100] sm:$0xff]
    %v344 = vld [vmem:[#allocation2 + $0x108] sm:$0xff]
    %v345 = vld [vmem:[#allocation2 + $0x110] sm:$0xff]
    %v346 = vld [vmem:[#allocation2 + $0x118] sm:$0xff]
    %v347 = vld [vmem:[#allocation2 + $0x120] sm:$0xff]
    %v348 = vld [vmem:[#allocation2 + $0x128] sm:$0x1]
    %v349 = vlaneseq
    %v350 = vshrl.u32 %v349, 7
    %v351 = vsub.s32 0, %v350
    %v352 = vrot.slane %v348, %v351
    %353 = vmatprep.subr.mxu0 0.0
    %354 = vmatpush1.msra.mxu0 %v340
    %355 = vmatprep.subr.mxu0 0.0
    %356 = vmatpush1.msra.mxu0 %v341
    %357 = vmatprep.subr.mxu0 0.0
    %358 = vmatpush1.msra.mxu0 %v342
    %359 = vmatprep.subr.mxu0 0.0
    %360 = vmatpush1.msra.mxu0 %v343
    %361 = vmatprep.subr.mxu0 0.0
    %362 = vmatpush1.msra.mxu0 %v344
    %363 = vmatprep.subr.mxu0 0.0
    %364 = vmatpush1.msra.mxu0 %v345
    %365 = vmatprep.subr.mxu0 0.0
    %366 = vmatpush1.msra.mxu0 %v346
    %367 = vmatprep.subr.mxu0 0.0
    %368 = vmatpush1.msra.mxu0 %v347
    %369 = vmatprep.subr.mxu0 0.0
    %370 = vmatpush1.msra.mxu0 0.0
    %371 = vmatprep.subr.mxu0 0.0
    %372 = vmatpush1.msra.mxu0 0.0
    %373 = vmatprep.subr.mxu0 0.0
    %374 = vmatpush1.msra.mxu0 0.0
    %375 = vmatprep.subr.mxu0 0.0
    %376 = vmatpush1.msra.mxu0 0.0
    %377 = vmatprep.subr.mxu0 0.0
    %378 = vmatpush1.msra.mxu0 0.0
    %379 = vmatprep.subr.mxu0 0.0
    %380 = vmatpush1.msra.mxu0 0.0
    %381 = vmatprep.subr.mxu0 0.0
    %382 = vmatpush1.msra.mxu0 0.0
    %383 = vmatprep.subr.mxu0 0.0
    %384 = vmatpush1.msra.mxu0 0.0
    %385 = vmatprep.subr.mxu0 0.0
    %386 = vmatpush1.msra.mxu0 0.0
    %387 = vmatprep.subr.mxu0 0.0
    %388 = vmatpush1.msra.mxu0 0.0
    %389 = vmatprep.subr.mxu0 0.0
    %390 = vmatpush1.msra.mxu0 0.0
    %391 = vmatprep.subr.mxu0 0.0
    %392 = vmatpush1.msra.mxu0 0.0
    %393 = vmatprep.subr.mxu0 0.0
    %394 = vmatpush1.msra.mxu0 0.0
    %395 = vmatprep.subr.mxu0 0.0
    %396 = vmatpush1.msra.mxu0 0.0
    %397 = vmatprep.subr.mxu0 0.0
    %398 = vmatpush1.msra.mxu0 0.0
    %399 = vmatprep.subr.mxu0 0.0
    %400 = vmatpush1.msra.mxu0 0.0
    %401 = vmatprep.subr.mxu0 0.0
    %402 = vmatpush1.msra.mxu0 0.0
    %403 = vmatprep.subr.mxu0 0.0
    %404 = vmatpush1.msra.mxu0 0.0
    %405 = vmatprep.subr.mxu0 0.0
    %406 = vmatpush1.msra.mxu0 0.0
    %407 = vmatprep.subr.mxu0 0.0
    %408 = vmatpush1.msra.mxu0 0.0
    %409 = vmatprep.subr.mxu0 0.0
    %410 = vmatpush1.msra.mxu0 0.0
    %411 = vmatprep.subr.mxu0 0.0
    %412 = vmatpush1.msra.mxu0 0.0
    %413 = vmatprep.subr.mxu0 0.0
    %414 = vmatpush1.msra.mxu0 0.0
    %415 = vmatprep.subr.mxu0 0.0
    %416 = vmatpush1.msra.mxu0 0.0
    %417 = vmatprep.mubr.f32.mxu0 0.0
    %418 = vmatmul.mubr.f32.gmra.mrb[0].mxu0 %v223
    %v419 = vpop.f32.mrb[0].mxu0
    %v420 = vadd.f32 %v352, %v419
    %v421 = vpop.f32.mrb[0].mxu0
    %422 = vdwg.mxu0
    %v423 = vlaneseq
    %v424 = vshrl.u32 %v423, 7
    %v425 = vld [vmem:[%s2] sm:$0xff]
    %v426 = vld [vmem:[%s2 + $0x8] sm:$0x3]
    %vm427 = vcmp.eq.s32.totalorder %v207, 0
    %v428 = vsel %vm427, 1, 0
    %vm429 = vcmp.eq.s32.totalorder %v428, 1
    %v430 = vsel %vm429, %v324, 0.0
    %v431 = vsel %vm429, %v325, 0.0
    %vm432 = vcmask 64512
    %v433 = vsel %vm432, %v430, 0.0
    %434 = vadd.xlane.f32.xlu0 %v433
    %v435 = vpop.xlane.xlu0 %434
    %vm436 = vcmask 58368
    %v437 = vsel %vm436, %v431, 0.0
    %438 = vadd.xlane.f32.xlu0 %v437
    %v439 = vpop.xlane.xlu0 %438
    %vm440 = vcmp.eq.s32.totalorder %v424, 0
    %v441 = vsel %vm440, 1, 0
    %vm442 = vcmp.eq.s32.totalorder %v441, 1
    %v443 = vsel %vm442, %v420, 0.0
    %v444 = vsel %vm432, %v443, 0.0
    %v445 = vrot.slane %v444, 4
    %v446 = vadd.f32 %v444, %v445
    %v447 = vrot.slane %v446, 2
    %v448 = vadd.f32 %v446, %v447
    %v449 = vrot.slane %v448, 1
    %v450 = vadd.f32 %v448, %v449
    %v451 = vmul.f32 %v425, %v435
    %v452 = vmul.f32 %v426, %v439
    %v453 = vsel %vm432, %v451, 0.0
    %v454 = vsel %vm436, %v452, 0.0
    %v455 = vadd.f32 %v453, %v454
    %v456 = vrot.slane %v455, 4
    %v457 = vadd.f32 %v455, %v456
    %v458 = vrot.slane %v457, 2
    %v459 = vadd.f32 %v457, %v458
    %v460 = vrot.slane %v459, 1
    %v461 = vadd.f32 %v459, %v460
    %v462 = vsub.f32 1.0, %v435
    %v463 = vsub.f32 1.0, %v439
    %v464 = vmul.f32 %v425, %v462
    %v465 = vmul.f32 %v426, %v463
    %v466 = vmul.f32 %v450, %v435
    %v467 = vmul.f32 %v450, %v439
    %v468 = vadd.f32 %v464, %v466
    %v469 = vadd.f32 %v465, %v467
    %v470 = vsel %vm442, %v461, 0.0
    %v471 = vadd.f32 %v470, 0.0
    %vm472 = vcmp.eq.s32.totalorder %v207, 1
    %v473 = vsel %vm472, 1, 0
    %vm474 = vcmp.eq.s32.totalorder %v473, 1
    %v475 = vsel %vm474, %v324, 0.0
    %v476 = vsel %vm474, %v325, 0.0
    %v477 = vsel %vm432, %v475, 0.0
    %478 = vadd.xlane.f32.xlu0 %v477
    %v479 = vpop.xlane.xlu0 %478
    %v480 = vsel %vm436, %v476, 0.0
    %481 = vadd.xlane.f32.xlu0 %v480
    %v482 = vpop.xlane.xlu0 %481
    %vm483 = vcmp.eq.s32.totalorder %v424, 1
    %v484 = vsel %vm483, 1, 0
    %vm485 = vcmp.eq.s32.totalorder %v484, 1
    %v486 = vsel %vm485, %v420, 0.0
    %v487 = vsel %vm432, %v486, 0.0
    %v488 = vrot.slane %v487, 4
    %v489 = vadd.f32 %v487, %v488
    %v490 = vrot.slane %v489, 2
    %v491 = vadd.f32 %v489, %v490
    %v492 = vrot.slane %v491, 1
    %v493 = vadd.f32 %v491, %v492
    %v494 = vmul.f32 %v468, %v479
    %v495 = vmul.f32 %v469, %v482
    %v496 = vsel %vm432, %v494, 0.0
    %v497 = vsel %vm436, %v495, 0.0
    %v498 = vadd.f32 %v496, %v497
    %v499 = vrot.slane %v498, 4
    %v500 = vadd.f32 %v498, %v499
    %v501 = vrot.slane %v500, 2
    %v502 = vadd.f32 %v500, %v501
    %v503 = vrot.slane %v502, 1
    %v504 = vadd.f32 %v502, %v503
    %v505 = vsub.f32 1.0, %v479
    %v506 = vsub.f32 1.0, %v482
    %v507 = vmul.f32 %v468, %v505
    %v508 = vmul.f32 %v469, %v506
    %v509 = vmul.f32 %v493, %v479
    %v510 = vmul.f32 %v493, %v482
    %v511 = vadd.f32 %v507, %v509
    %v512 = vadd.f32 %v508, %v510
    %v513 = vsel %vm485, %v504, 0.0
    %v514 = vadd.f32 %v471, %v513
    %vm515 = vcmp.eq.s32.totalorder %v207, 2
    %v516 = vsel %vm515, 1, 0
    %vm517 = vcmp.eq.s32.totalorder %v516, 1
    %v518 = vsel %vm517, %v324, 0.0
    %v519 = vsel %vm517, %v325, 0.0
    %v520 = vsel %vm432, %v518, 0.0
    %521 = vadd.xlane.f32.xlu0 %v520
    %v522 = vpop.xlane.xlu0 %521
    %v523 = vsel %vm436, %v519, 0.0
    %524 = vadd.xlane.f32.xlu0 %v523
    %v525 = vpop.xlane.xlu0 %524
    %vm526 = vcmp.eq.s32.totalorder %v424, 2
    %v527 = vsel %vm526, 1, 0
    %vm528 = vcmp.eq.s32.totalorder %v527, 1
    %v529 = vsel %vm528, %v420, 0.0
    %v530 = vsel %vm432, %v529, 0.0
    %v531 = vrot.slane %v530, 4
    %v532 = vadd.f32 %v530, %v531
    %v533 = vrot.slane %v532, 2
    %v534 = vadd.f32 %v532, %v533
    %v535 = vrot.slane %v534, 1
    %v536 = vadd.f32 %v534, %v535
    %v537 = vmul.f32 %v511, %v522
    %v538 = vmul.f32 %v512, %v525
    %v539 = vsel %vm432, %v537, 0.0
    %v540 = vsel %vm436, %v538, 0.0
    %v541 = vadd.f32 %v539, %v540
    %v542 = vrot.slane %v541, 4
    %v543 = vadd.f32 %v541, %v542
    %v544 = vrot.slane %v543, 2
    %v545 = vadd.f32 %v543, %v544
    %v546 = vrot.slane %v545, 1
    %v547 = vadd.f32 %v545, %v546
    %v548 = vsub.f32 1.0, %v522
    %v549 = vsub.f32 1.0, %v525
    %v550 = vmul.f32 %v511, %v548
    %v551 = vmul.f32 %v512, %v549
    %v552 = vmul.f32 %v536, %v522
    %v553 = vmul.f32 %v536, %v525
    %v554 = vadd.f32 %v550, %v552
    %v555 = vadd.f32 %v551, %v553
    %v556 = vsel %vm528, %v547, 0.0
    %v557 = vadd.f32 %v514, %v556
    %vm558 = vcmp.eq.s32.totalorder %v207, 3
    %v559 = vsel %vm558, 1, 0
    %vm560 = vcmp.eq.s32.totalorder %v559, 1
    %v561 = vsel %vm560, %v324, 0.0
    %v562 = vsel %vm560, %v325, 0.0
    %v563 = vsel %vm432, %v561, 0.0
    %564 = vadd.xlane.f32.xlu0 %v563
    %v565 = vpop.xlane.xlu0 %564
    %v566 = vsel %vm436, %v562, 0.0
    %567 = vadd.xlane.f32.xlu0 %v566
    %v568 = vpop.xlane.xlu0 %567
    %vm569 = vcmp.eq.s32.totalorder %v424, 3
    %v570 = vsel %vm569, 1, 0
    %vm571 = vcmp.eq.s32.totalorder %v570, 1
    %v572 = vsel %vm571, %v420, 0.0
    %v573 = vsel %vm432, %v572, 0.0
    %v574 = vrot.slane %v573, 4
    %v575 = vadd.f32 %v573, %v574
    %v576 = vrot.slane %v575, 2
    %v577 = vadd.f32 %v575, %v576
    %v578 = vrot.slane %v577, 1
    %v579 = vadd.f32 %v577, %v578
    %v580 = vmul.f32 %v554, %v565
    %v581 = vmul.f32 %v555, %v568
    %v582 = vsel %vm432, %v580, 0.0
    %v583 = vsel %vm436, %v581, 0.0
    %v584 = vadd.f32 %v582, %v583
    %v585 = vrot.slane %v584, 4
    %v586 = vadd.f32 %v584, %v585
    %v587 = vrot.slane %v586, 2
    %v588 = vadd.f32 %v586, %v587
    %v589 = vrot.slane %v588, 1
    %v590 = vadd.f32 %v588, %v589
    %v591 = vsub.f32 1.0, %v565
    %v592 = vsub.f32 1.0, %v568
    %v593 = vmul.f32 %v554, %v591
    %v594 = vmul.f32 %v555, %v592
    %v595 = vmul.f32 %v579, %v565
    %v596 = vmul.f32 %v579, %v568
    %v597 = vadd.f32 %v593, %v595
    %v598 = vadd.f32 %v594, %v596
    %v599 = vsel %vm571, %v590, 0.0
    %v600 = vadd.f32 %v557, %v599
    %vm601 = vcmp.eq.s32.totalorder %v207, 4
    %v602 = vsel %vm601, 1, 0
    %vm603 = vcmp.eq.s32.totalorder %v602, 1
    %v604 = vsel %vm603, %v324, 0.0
    %v605 = vsel %vm603, %v325, 0.0
    %v606 = vsel %vm432, %v604, 0.0
    %607 = vadd.xlane.f32.xlu0 %v606
    %v608 = vpop.xlane.xlu0 %607
    %v609 = vsel %vm436, %v605, 0.0
    %610 = vadd.xlane.f32.xlu0 %v609
    %v611 = vpop.xlane.xlu0 %610
    %vm612 = vcmp.eq.s32.totalorder %v424, 4
    %v613 = vsel %vm612, 1, 0
    %vm614 = vcmp.eq.s32.totalorder %v613, 1
    %v615 = vsel %vm614, %v420, 0.0
    %v616 = vsel %vm432, %v615, 0.0
    %v617 = vrot.slane %v616, 4
    %v618 = vadd.f32 %v616, %v617
    %v619 = vrot.slane %v618, 2
    %v620 = vadd.f32 %v618, %v619
    %v621 = vrot.slane %v620, 1
    %v622 = vadd.f32 %v620, %v621
    %v623 = vmul.f32 %v597, %v608
    %v624 = vmul.f32 %v598, %v611
    %v625 = vsel %vm432, %v623, 0.0
    %v626 = vsel %vm436, %v624, 0.0
    %v627 = vadd.f32 %v625, %v626
    %v628 = vrot.slane %v627, 4
    %v629 = vadd.f32 %v627, %v628
    %v630 = vrot.slane %v629, 2
    %v631 = vadd.f32 %v629, %v630
    %v632 = vrot.slane %v631, 1
    %v633 = vadd.f32 %v631, %v632
    %v634 = vsub.f32 1.0, %v608
    %v635 = vsub.f32 1.0, %v611
    %v636 = vmul.f32 %v597, %v634
    %v637 = vmul.f32 %v598, %v635
    %v638 = vmul.f32 %v622, %v608
    %v639 = vmul.f32 %v622, %v611
    %v640 = vadd.f32 %v636, %v638
    %v641 = vadd.f32 %v637, %v639
    %v642 = vsel %vm614, %v633, 0.0
    %v643 = vadd.f32 %v600, %v642
    %vm644 = vcmp.eq.s32.totalorder %v207, 5
    %v645 = vsel %vm644, 1, 0
    %vm646 = vcmp.eq.s32.totalorder %v645, 1
    %v647 = vsel %vm646, %v324, 0.0
    %v648 = vsel %vm646, %v325, 0.0
    %v649 = vsel %vm432, %v647, 0.0
    %650 = vadd.xlane.f32.xlu0 %v649
    %v651 = vpop.xlane.xlu0 %650
    %v652 = vsel %vm436, %v648, 0.0
    %653 = vadd.xlane.f32.xlu0 %v652
    %v654 = vpop.xlane.xlu0 %653
    %vm655 = vcmp.eq.s32.totalorder %v424, 5
    %v656 = vsel %vm655, 1, 0
    %vm657 = vcmp.eq.s32.totalorder %v656, 1
    %v658 = vsel %vm657, %v420, 0.0
    %v659 = vsel %vm432, %v658, 0.0
    %v660 = vrot.slane %v659, 4
    %v661 = vadd.f32 %v659, %v660
    %v662 = vrot.slane %v661, 2
    %v663 = vadd.f32 %v661, %v662
    %v664 = vrot.slane %v663, 1
    %v665 = vadd.f32 %v663, %v664
    %v666 = vmul.f32 %v640, %v651
    %v667 = vmul.f32 %v641, %v654
    %v668 = vsel %vm432, %v666, 0.0
    %v669 = vsel %vm436, %v667, 0.0
    %v670 = vadd.f32 %v668, %v669
    %v671 = vrot.slane %v670, 4
    %v672 = vadd.f32 %v670, %v671
    %v673 = vrot.slane %v672, 2
    %v674 = vadd.f32 %v672, %v673
    %v675 = vrot.slane %v674, 1
    %v676 = vadd.f32 %v674, %v675
    %v677 = vsub.f32 1.0, %v651
    %v678 = vsub.f32 1.0, %v654
    %v679 = vmul.f32 %v640, %v677
    %v680 = vmul.f32 %v641, %v678
    %v681 = vmul.f32 %v665, %v651
    %v682 = vmul.f32 %v665, %v654
    %v683 = vadd.f32 %v679, %v681
    %v684 = vadd.f32 %v680, %v682
    %v685 = vsel %vm657, %v676, 0.0
    %v686 = vadd.f32 %v643, %v685
    %vm687 = vcmp.eq.s32.totalorder %v207, 6
    %v688 = vsel %vm687, 1, 0
    %vm689 = vcmp.eq.s32.totalorder %v688, 1
    %v690 = vsel %vm689, %v324, 0.0
    %v691 = vsel %vm689, %v325, 0.0
    %v692 = vsel %vm432, %v690, 0.0
    %693 = vadd.xlane.f32.xlu0 %v692
    %v694 = vpop.xlane.xlu0 %693
    %v695 = vsel %vm436, %v691, 0.0
    %696 = vadd.xlane.f32.xlu0 %v695
    %v697 = vpop.xlane.xlu0 %696
    %vm698 = vcmp.eq.s32.totalorder %v424, 6
    %v699 = vsel %vm698, 1, 0
    %vm700 = vcmp.eq.s32.totalorder %v699, 1
    %v701 = vsel %vm700, %v420, 0.0
    %v702 = vsel %vm432, %v701, 0.0
    %v703 = vrot.slane %v702, 4
    %v704 = vadd.f32 %v702, %v703
    %v705 = vrot.slane %v704, 2
    %v706 = vadd.f32 %v704, %v705
    %v707 = vrot.slane %v706, 1
    %v708 = vadd.f32 %v706, %v707
    %v709 = vmul.f32 %v683, %v694
    %v710 = vmul.f32 %v684, %v697
    %v711 = vsel %vm432, %v709, 0.0
    %v712 = vsel %vm436, %v710, 0.0
    %v713 = vadd.f32 %v711, %v712
    %v714 = vrot.slane %v713, 4
    %v715 = vadd.f32 %v713, %v714
    %v716 = vrot.slane %v715, 2
    %v717 = vadd.f32 %v715, %v716
    %v718 = vrot.slane %v717, 1
    %v719 = vadd.f32 %v717, %v718
    %v720 = vsub.f32 1.0, %v694
    %v721 = vsub.f32 1.0, %v697
    %v722 = vmul.f32 %v683, %v720
    %v723 = vmul.f32 %v684, %v721
    %v724 = vmul.f32 %v708, %v694
    %v725 = vmul.f32 %v708, %v697
    %v726 = vadd.f32 %v722, %v724
    %v727 = vadd.f32 %v723, %v725
    %v728 = vsel %vm700, %v719, 0.0
    %v729 = vadd.f32 %v686, %v728
    %vm730 = vcmp.eq.s32.totalorder %v207, 7
    %v731 = vsel %vm730, 1, 0
    %vm732 = vcmp.eq.s32.totalorder %v731, 1
    %v733 = vsel %vm732, %v324, 0.0
    %v734 = vsel %vm732, %v325, 0.0
    %v735 = vsel %vm432, %v733, 0.0
    %736 = vadd.xlane.f32.xlu0 %v735
    %v737 = vpop.xlane.xlu0 %736
    %v738 = vsel %vm436, %v734, 0.0
    %739 = vadd.xlane.f32.xlu0 %v738
    %v740 = vpop.xlane.xlu0 %739
    %vm741 = vcmp.eq.s32.totalorder %v424, 7
    %v742 = vsel %vm741, 1, 0
    %vm743 = vcmp.eq.s32.totalorder %v742, 1
    %v744 = vsel %vm743, %v420, 0.0
    %v745 = vsel %vm432, %v744, 0.0
    %v746 = vrot.slane %v745, 4
    %v747 = vadd.f32 %v745, %v746
    %v748 = vrot.slane %v747, 2
    %v749 = vadd.f32 %v747, %v748
    %v750 = vrot.slane %v749, 1
    %v751 = vadd.f32 %v749, %v750
    %v752 = vmul.f32 %v726, %v737
    %v753 = vmul.f32 %v727, %v740
    %v754 = vsel %vm432, %v752, 0.0
    %v755 = vsel %vm436, %v753, 0.0
    %v756 = vadd.f32 %v754, %v755
    %v757 = vrot.slane %v756, 4
    %v758 = vadd.f32 %v756, %v757
    %v759 = vrot.slane %v758, 2
    %v760 = vadd.f32 %v758, %v759
    %v761 = vrot.slane %v760, 1
    %v762 = vadd.f32 %v760, %v761
    %v763 = vsub.f32 1.0, %v737
    %v764 = vsub.f32 1.0, %v740
    %v765 = vmul.f32 %v726, %v763
    %v766 = vmul.f32 %v727, %v764
    %v767 = vmul.f32 %v751, %v737
    %v768 = vmul.f32 %v751, %v740
    %v769 = vadd.f32 %v765, %v767
    %v770 = vadd.f32 %v766, %v768
    %v771 = vsel %vm743, %v762, 0.0
    %v772 = vadd.f32 %v729, %v771
    %v773 = vld [vmem:[#allocation2 + $0x130] sm:$0xff]
    %v775 = vsel %vm432, %v772, 0
    %777 = vmatprep.subr.mxu0 0.0
    %778 = vmatpush1.msra.mxu0 %v773
    %779 = vmatprep.subr.mxu0 0.0
    %780 = vmatpush1.msra.mxu0 0.0
    %781 = vmatprep.subr.mxu0 0.0
    %782 = vmatpush1.msra.mxu0 0.0
    %783 = vmatprep.subr.mxu0 0.0
    %784 = vmatpush1.msra.mxu0 0.0
    %785 = vmatprep.subr.mxu0 0.0
    %786 = vmatpush1.msra.mxu0 0.0
    %787 = vmatprep.subr.mxu0 0.0
    %788 = vmatpush1.msra.mxu0 0.0
    %789 = vmatprep.subr.mxu0 0.0
    %790 = vmatpush1.msra.mxu0 0.0
    %791 = vmatprep.subr.mxu0 0.0
    %792 = vmatpush1.msra.mxu0 0.0
    %793 = vmatprep.subr.mxu0 0.0
    %794 = vmatpush1.msra.mxu0 0.0
    %795 = vmatprep.subr.mxu0 0.0
    %796 = vmatpush1.msra.mxu0 0.0
    %797 = vmatprep.subr.mxu0 0.0
    %798 = vmatpush1.msra.mxu0 0.0
    %799 = vmatprep.subr.mxu0 0.0
    %800 = vmatpush1.msra.mxu0 0.0
    %801 = vmatprep.subr.mxu0 0.0
    %802 = vmatpush1.msra.mxu0 0.0
    %803 = vmatprep.subr.mxu0 0.0
    %804 = vmatpush1.msra.mxu0 0.0
    %805 = vmatprep.subr.mxu0 0.0
    %806 = vmatpush1.msra.mxu0 0.0
    %807 = vmatprep.subr.mxu0 0.0
    %808 = vmatpush1.msra.mxu0 0.0
    %809 = vmatprep.subr.mxu0 0.0
    %810 = vmatpush1.msra.mxu0 0.0
    %811 = vmatprep.subr.mxu0 0.0
    %812 = vmatpush1.msra.mxu0 0.0
    %813 = vmatprep.subr.mxu0 0.0
    %814 = vmatpush1.msra.mxu0 0.0
    %815 = vmatprep.subr.mxu0 0.0
    %816 = vmatpush1.msra.mxu0 0.0
    %817 = vmatprep.subr.mxu0 0.0
    %818 = vmatpush1.msra.mxu0 0.0
    %819 = vmatprep.subr.mxu0 0.0
    %820 = vmatpush1.msra.mxu0 0.0
    %821 = vmatprep.subr.mxu0 0.0
    %822 = vmatpush1.msra.mxu0 0.0
    %823 = vmatprep.subr.mxu0 0.0
    %824 = vmatpush1.msra.mxu0 0.0
    %825 = vmatprep.subr.mxu0 0.0
    %826 = vmatpush1.msra.mxu0 0.0
    %827 = vmatprep.subr.mxu0 0.0
    %828 = vmatpush1.msra.mxu0 0.0
    %829 = vmatprep.subr.mxu0 0.0
    %830 = vmatpush1.msra.mxu0 0.0
    %831 = vmatprep.subr.mxu0 0.0
    %832 = vmatpush1.msra.mxu0 0.0
    %833 = vmatprep.subr.mxu0 0.0
    %834 = vmatpush1.msra.mxu0 0.0
    %835 = vmatprep.subr.mxu0 0.0
    %836 = vmatpush1.msra.mxu0 0.0
    %837 = vmatprep.subr.mxu0 0.0
    %838 = vmatpush1.msra.mxu0 0.0
    %839 = vmatprep.subr.mxu0 0.0
    %840 = vmatpush1.msra.mxu0 0.0
    %841 = vmatprep.mubr.f32.mxu0 0.0
    %842 = vmatmul.mubr.f32.gmra.mrb[0].mxu0 %v775
    %v843 = vpop.f32.mrb[0].mxu0
    %v844 = vadd.f32 0.0, %v843
    %v845 = vpop.f32.mrb[0].mxu0
    %846 = vdwg.mxu0
    %v847 = vadd.f32 %v420, %v844
    %848 = vst [vmem:[#allocation5] sm:$0xff] %v847
    %849 = vst.msk [vmem:[%s4] sm:$0xff] %vm432, %v769
    %850 = vst.msk [vmem:[%s4 + $0x8] sm:$0x3] %vm436, %v770
    // Predicated region
    $region18: #{tpu_custom_call.1} parent=1 // pred_check
      _
    $region19: #{tpu_custom_call.1} parent=1 // pred_check_branch
      %852 = sbr.rel (0) target = $region21
    $region20: #{tpu_custom_call.1} parent=1 // pred_region
      %s854 = ssub.s32 128, 128
      %855 = vsyncadd [#allocation4], %s854
      %s857 = sshll.u32 [#allocation5], 4
      %s858 = int_to_ptr.vmem [resolvable:$true] %s857
      %860 = dma.vmem_to_hbm [thread:$0]  %s858, 128, %s3, [#allocation4]
    $region21: #{tpu_custom_call.1} parent=1 // pred_fallthru
      _
    // Predicated region
    $region22: #{tpu_custom_call.1} parent=1 // pred_check
      _
    $region23: #{tpu_custom_call.1} parent=1 // pred_check_branch
      %862 = sbr.rel (0) target = $region25
    $region24: #{tpu_custom_call.1} parent=1 // pred_region
      _
    $region25: #{tpu_custom_call.1} parent=1 // pred_fallthru
      _
    // Predicated region
    $region26: #{tpu_custom_call.1} parent=1 // pred_check
      _
    $region27: #{tpu_custom_call.1} parent=1 // pred_check_branch
      %864 = sbr.rel (0) target = $region29
    $region28: #{tpu_custom_call.1} parent=1 // pred_region
      %865 = dma.done [#allocation4], 128
    $region29: #{tpu_custom_call.1} parent=1 // pred_fallthru
      _
    // Predicated region
    $region30: #{tpu_custom_call.1} parent=1 // pred_check
      _
    $region31: #{tpu_custom_call.1} parent=1 // pred_check_branch
      %867 = sbr.rel (0) target = $region33
    $region32: #{tpu_custom_call.1} parent=1 // pred_region
      _
    $region33: #{tpu_custom_call.1} parent=1 // pred_fallthru
      _
    %868 = vsyncpa [#allocation3], 1
    %869 = vsyncpa [#allocation4], 1

</llo_original>
